<compile_context>
chip_gen: v6e
topology: v6e:2x2x1
jax: 0.10.0
libtpu: 0.0.40
codegen_flags: <defaults>
</compile_context>

<pallas_src>
import jax
import jax.numpy as jnp
from jax import lax
from jax.experimental import pallas as pl
from jax.experimental.pallas import tpu as pltpu


def _round_up(x: int, m: int) -> int:
    return ((x + m - 1) // m) * m


def _linear_sigmoid_split_kernel(x_ref, w_ref, b_ref, f_ref, i_ref):
    # x_ref: (TILE, 6) f32   w_ref: (2, 6) f32   b_ref: (2, 1) f32
    # f_ref, i_ref: (1, TILE) f32  (lane-dense outputs)
    #
    # y = W @ x^T  -> (2, TILE): contract feature dims so rows land on lanes.
    y = lax.dot_general(
        w_ref[...], x_ref[...],
        dimension_numbers=(((1,), (1,)), ((), ())),
        preferred_element_type=jnp.float32,
    )
    y = jax.nn.sigmoid(y + b_ref[...])   # (2,1) bias broadcast over lanes
    f_ref[...] = y[0:1, :]
    i_ref[...] = y[1:2, :]


def fast_meta_optimizer_forward(x, weight, bias, *, tile_rows=2048,
                                min_rows_for_pallas=128):
    """Equivalent of FastMetaOptimizer.forward.

    Args:
      x:      (N, 6) float32
      weight: (2, 6) float32  (PyTorch nn.Linear: out_features x in_features)
      bias:   (2,)   float32  (bias[0] == 1 per the module's __init__)

    Returns:
      (f, i): two arrays of shape (N, 1), matching torch `x.split(1, 1)`.
    """
    x = x.astype(jnp.float32)
    weight = weight.astype(jnp.float32)
    bias = bias.astype(jnp.float32)
    n = x.shape[0]

    # Tiny-N fallback: XLA's fused small-dot + sigmoid beats pallas_call
    # launch overhead when there is almost no work.
    if n < min_rows_for_pallas:
        out = jax.nn.sigmoid(x @ weight.T + bias)
        return out[:, 0:1], out[:, 1:2]

    # Tile: multiple of 128 (lane-dense output blocks), capped at tile_rows.
    # Padded VMEM footprint per step (double-buffered) is ~1.2 KiB/row, so the
    # default 2048-row tile stays well inside every generation's scoped VMEM.
    tile = min(tile_rows, _round_up(n, 128))
    n_pad = _round_up(n, tile)
    x_pad = jnp.pad(x, ((0, n_pad - n), (0, 0))) if n_pad != n else x

    w = weight                 # (2, 6) — kept as-is (resident block)
    b2d = bias.reshape(2, 1)   # (2, 1) — broadcasts over the lane (row) dim

    grid = (n_pad // tile,)

    f2d, i2d = pl.pallas_call(
        _linear_sigmoid_split_kernel,
        out_shape=(
            jax.ShapeDtypeStruct((1, n_pad), jnp.float32),
            jax.ShapeDtypeStruct((1, n_pad), jnp.float32),
        ),
        grid_spec=pltpu.PrefetchScalarGridSpec(
            num_scalar_prefetch=0,
            grid=grid,
            in_specs=[
                pl.BlockSpec((tile, 6), lambda i: (i, 0)),   # x tile
                pl.BlockSpec((2, 6), lambda i: (0, 0)),      # weight (resident)
                pl.BlockSpec((2, 1), lambda i: (0, 0)),      # bias   (resident)
            ],
            out_specs=[
                pl.BlockSpec((1, tile), lambda i: (0, i)),   # f (lane-dense)
                pl.BlockSpec((1, tile), lambda i: (0, i)),   # i (lane-dense)
            ],
        ),
        compiler_params=pltpu.CompilerParams(
            dimension_semantics=("parallel",)),
    )(x_pad, w, b2d)

    # (1, N_pad) -> drop padding -> (N, 1).  Row-major (1, N) and (N, 1) share
    # the same linear layout, so the reshape is free.
    f = f2d[0, :n].reshape(n, 1)
    i = i2d[0, :n].reshape(n, 1)
    return f, i


def _reference_forward(x, weight, bias):
    out = jax.nn.sigmoid(x @ weight.T + bias)
    return out[:, 0:1], out[:, 1:2]


if __name__ == "__main__":
    key = jax.random.PRNGKey(0)
    k_x, k_w, k_b = jax.random.split(key, 3)

    # Rows = number of flattened parameters fed to the meta-optimizer.
    # Chosen non-multiple-of-tile to exercise the padded tail path.
    N = 5003
    x = jax.random.normal(k_x, (N, 6), dtype=jnp.float32)

    bound = 1.0 / jnp.sqrt(6.0)  # nn.Linear default uniform bound
    weight = jax.random.uniform(k_w, (2, 6), minval=-bound, maxval=bound,
                                dtype=jnp.float32)
    bias = jax.random.uniform(k_b, (2,), minval=-bound, maxval=bound,
                              dtype=jnp.float32)
    bias = bias.at[0].set(1.0)   # linear1.bias.data[0] = 1

    # Pallas path (N >= min_rows_for_pallas).
    f, i = fast_meta_optimizer_forward(x, weight, bias)
    jax.block_until_ready((f, i))

    f_ref, i_ref = _reference_forward(x, weight, bias)
    assert f.shape == (N, 1) and i.shape == (N, 1)
    assert jnp.allclose(f, f_ref, atol=1e-5, rtol=1e-5)
    assert jnp.allclose(i, i_ref, atol=1e-5, rtol=1e-5)

    # Tiny-N fallback path (pure XLA), semantics identical.
    x_small = jax.random.normal(k_x, (8, 6), dtype=jnp.float32)
    f_s, i_s = fast_meta_optimizer_forward(x_small, weight, bias)
    f_s_ref, i_s_ref = _reference_forward(x_small, weight, bias)
    assert jnp.allclose(f_s, f_s_ref, atol=1e-5, rtol=1e-5)
    assert jnp.allclose(i_s, i_s_ref, atol=1e-5, rtol=1e-5)

    print("KERNEL_OK")
</pallas_src>

<mosaic_0001>
module attributes {stable_mosaic.version = 11 : i64} {
  func.func @_linear_sigmoid_split_kernel(%arg0: i32, %arg1: memref<2048x6xf32, #tpu.memory_space<vmem>>, %arg2: memref<2x6xf32, #tpu.memory_space<vmem>>, %arg3: memref<2x1xf32, #tpu.memory_space<vmem>>, %arg4: memref<1x2048xf32, #tpu.memory_space<vmem>>, %arg5: memref<1x2048xf32, #tpu.memory_space<vmem>>) attributes {dimension_semantics = [#tpu.dimension_semantics<parallel>], iteration_bounds = array<i64: 3>, scalar_prefetch = 0 : i64, scratch_operands = 0 : i64, tpu.core_type = #tpu.core_type<tc>, window_params = [{transform_indices = @transform_0, window_bounds = array<i64: 2048, 6>}, {pipeline_mode = #tpu.pipeline_mode<synchronous>, transform_indices = @transform_1, window_bounds = array<i64: 2, 6>}, {pipeline_mode = #tpu.pipeline_mode<synchronous>, transform_indices = @transform_2, window_bounds = array<i64: 2, 1>}, {transform_indices = @transform_3, window_bounds = array<i64: 1, 2048>}, {transform_indices = @transform_4, window_bounds = array<i64: 1, 2048>}]} {
    %c0 = arith.constant 0 : index
    %c0_0 = arith.constant 0 : index
    %0 = vector.load %arg2[%c0, %c0_0] : memref<2x6xf32, #tpu.memory_space<vmem>>, vector<2x6xf32>
    %c0_1 = arith.constant 0 : index
    %c0_2 = arith.constant 0 : index
    %1 = vector.load %arg1[%c0_1, %c0_2] : memref<2048x6xf32, #tpu.memory_space<vmem>>, vector<2048x6xf32>
    %cst = arith.constant dense<0.000000e+00> : vector<2x2048xf32>
    %2 = tpu.matmul %0, %1, %cst {dimension_numbers = #tpu.dot_dimension_numbers<[1], [1], [0], [0], [0, 0, 1, 0], [], []>} : vector<2x6xf32>, vector<2048x6xf32>, vector<2x2048xf32> -> vector<2x2048xf32>
    %c0_3 = arith.constant 0 : index
    %c0_4 = arith.constant 0 : index
    %3 = vector.load %arg3[%c0_3, %c0_4] : memref<2x1xf32, #tpu.memory_space<vmem>>, vector<2x1xf32>
    %4 = vector.broadcast %3 : vector<2x1xf32> to vector<2x2048xf32>
    %5 = arith.addf %2, %4 : vector<2x2048xf32>
    %6 = arith.negf %5 : vector<2x2048xf32>
    %7 = math.exp %6 : vector<2x2048xf32>
    %cst_5 = arith.constant 1.000000e+00 : f32
    %8 = vector.broadcast %cst_5 : f32 to vector<2x2048xf32>
    %9 = arith.addf %8, %7 : vector<2x2048xf32>
    %10 = arith.divf %8, %9 : vector<2x2048xf32>
    %11 = vector.extract_strided_slice %10 {offsets = [0, 0], sizes = [1, 2048], strides = [1, 1]} : vector<2x2048xf32> to vector<1x2048xf32>
    %c0_6 = arith.constant 0 : index
    %c0_7 = arith.constant 0 : index
    %12 = vector.load %arg4[%c0_6, %c0_7] : memref<1x2048xf32, #tpu.memory_space<vmem>>, vector<1x2048xf32>
    tpu.vector_store %arg4[%c0_6, %c0_7], %11 {strides = array<i32>} : memref<1x2048xf32, #tpu.memory_space<vmem>>, vector<1x2048xf32>,
    %13 = vector.extract_strided_slice %10 {offsets = [1, 0], sizes = [1, 2048], strides = [1, 1]} : vector<2x2048xf32> to vector<1x2048xf32>
    %c0_8 = arith.constant 0 : index
    %c0_9 = arith.constant 0 : index
    %14 = vector.load %arg5[%c0_8, %c0_9] : memref<1x2048xf32, #tpu.memory_space<vmem>>, vector<1x2048xf32>
    tpu.vector_store %arg5[%c0_8, %c0_9], %13 {strides = array<i32>} : memref<1x2048xf32, #tpu.memory_space<vmem>>, vector<1x2048xf32>,
    return
  }
  func.func @transform_0(%arg0: i32) -> (i32, i32) {
    %c0_i32 = arith.constant 0 : i32
    %c0_i32_0 = arith.constant 0 : i32
    return %arg0, %c0_i32 : i32, i32
  }
  func.func @transform_1(%arg0: i32) -> (i32, i32) {
    %c0_i32 = arith.constant 0 : i32
    %c0_i32_0 = arith.constant 0 : i32
    %c0_i32_1 = arith.constant 0 : i32
    return %c0_i32, %c0_i32_0 : i32, i32
  }
  func.func @transform_2(%arg0: i32) -> (i32, i32) {
    %c0_i32 = arith.constant 0 : i32
    %c0_i32_0 = arith.constant 0 : i32
    %c0_i32_1 = arith.constant 0 : i32
    return %c0_i32, %c0_i32_0 : i32, i32
  }
  func.func @transform_3(%arg0: i32) -> (i32, i32) {
    %c0_i32 = arith.constant 0 : i32
    %c0_i32_0 = arith.constant 0 : i32
    return %c0_i32, %arg0 : i32, i32
  }
  func.func @transform_4(%arg0: i32) -> (i32, i32) {
    %c0_i32 = arith.constant 0 : i32
    %c0_i32_0 = arith.constant 0 : i32
    return %c0_i32, %arg0 : i32, i32
  }
}

</mosaic_0001>

<llo_original>
// kernel: tpu_custom_call.1
$region0: #{tpu_custom_call.1}
  #allocation0 [shape = 'u32[]', space=smem, size = 0x4, offset = 0x4, fixed_abs, tag = 'smem constant byte address 0x4 - core index']
  #allocation1 [shape = 'u32[144,128]{1,0:T(1,128)}', space=vmem, size = 0x12000, scoped, tag = 'internal scratch']
  %s0 = inlined_call_operand.vmem [shape: f32[6144,6], index: 0, kind: input, shape index: {}]
  %s1 = inlined_call_operand.vmem [shape: f32[2,6], index: 1, kind: input, shape index: {}]
  %s2 = inlined_call_operand.vmem [shape: f32[2,1], index: 2, kind: input, shape index: {}]
  %s3 = inlined_call_operand.hbm [shape: f32[1,6144], index: 3, kind: output, shape index: {0}]
  %s4 = inlined_call_operand.hbm [shape: f32[1,6144], index: 4, kind: output, shape index: {1}]
  %5 = xla_tuple %s3, %s4
  %s6 = sld [smem:[#allocation0]]
  $region53: #{tpu_custom_call.1} parent=0
    _
  %s8 = ssub.s32 1, %s6
  %s9 = scalar_select 0, %s8, %s6
  $region1: #{tpu_custom_call.1} parent=0
    #allocation2 [shape = 'u8[16384]{0}', space=vmem, size = 0x4000, scoped, tag = 'output window, operand 0']
    #allocation3 [shape = 's32[2]{0}', space=sflag, size = 0x8, scoped, tag = 'scoped memory for tpu_custom_call.1']
    #allocation4 [shape = 'u8[16384]{0}', space=vmem, size = 0x4000, scoped, tag = 'output window, operand 1']
    #allocation5 [shape = 's32[2]{0}', space=sflag, size = 0x8, scoped, tag = 'scoped memory for tpu_custom_call.1']
    %10 = vsyncpa [#allocation3], 0
    %s11 = scalar_lea.sflag [#allocation3], 1
    %12 = vsyncpa %s11, 0
    %13 = vsyncpa [#allocation5], 0
    %s14 = scalar_lea.sflag [#allocation5], 1
    %15 = vsyncpa %s14, 0
    loop: start=0, step=1, limit=5
    $region2: #{tpu_custom_call.1} parent=1 // loop_pre_header
      _
    $region3: #{tpu_custom_call.1} parent=1 // loop_header
      %s17 = sphi 0, %s21
      %p18 = scmp.ge.s32.totalorder %s17, 5
      %s27 = sphi 0, %s29
      %s30 = sphi 0, %s27
      %s31 = sphi 0, %s30
      %s47 = sphi 0, %s31
      %s51 = sphi 0, %s51
      %s53 = sphi 0, %s51
      %s54 = sphi 0, %s53
      %s68 = sphi 0, %s54
      %s72 = sphi 0, %s72
      %s74 = sphi 0, %s72
      %s75 = sphi 0, %s74
      %s89 = sphi 0, %s75
      %s95 = sphi 0, %s97
      %s98 = sphi 0, %s95
      %s99 = sphi 0, %s98
      %s115 = sphi 0, %s99
      %s121 = sphi 0, %s123
      %s124 = sphi 0, %s121
      %s125 = sphi 0, %s124
      %s141 = sphi 0, %s125
    $region4: #{tpu_custom_call.1} parent=1 // loop_header_branch
      %20 = sbr.rel (%p18) target = $region8
    $region5: #{tpu_custom_call.1} parent=1 // loop_body
      %s22 = ssub.s32 %s17, 1
      %s23 = ssub.s32 %s17, 2
      %s24 = sadd.s32 %s17, 1
      %s25 = ssub.s32 %s17, %s24
      %p26 = scmp.eq.s32.totalorder %s25, 0
      %s28 = sadd.s32 %s27, 1
      %s29 = scalar_select %p26, %s27, %s28
      %p32 = pneg %p26
      %p33 = scmp.eq.s32.totalorder %s17, 2
      %p34 = por %p32, %p33
      %p35 = scmp.ne.s32.totalorder %s27, %s30
      %p36 = scmp.eq.s32.totalorder %s17, 0
      %p37 = por %p35, %p36
      %p38 = scmp.ne.s32.totalorder %s27, %s30
      %p39 = scmp.eq.s32.totalorder %s22, 2
      %p40 = por %p38, %p39
      %p41 = scmp.ne.s32.totalorder %s30, %s31
      %p42 = scmp.eq.s32.totalorder %s22, 0
      %p43 = por %p41, %p42
      %p44 = scmp.ne.s32.totalorder %s30, %s31
      %p45 = scmp.eq.s32.totalorder %s23, 2
      %p46 = por %p44, %p45
      %p48 = scmp.ne.s32.totalorder %s31, %s47
      %p49 = scmp.eq.s32.totalorder %s23, 0
      %p50 = por %p48, %p49
      %s52 = sadd.s32 %s51, 1
      %p55 = scmp.eq.s32.totalorder %s17, 2
      %p56 = scmp.ne.s32.totalorder %s51, %s53
      %p57 = scmp.eq.s32.totalorder %s17, 0
      %p58 = por %p56, %p57
      %p59 = scmp.ne.s32.totalorder %s51, %s53
      %p60 = scmp.eq.s32.totalorder %s22, 2
      %p61 = por %p59, %p60
      %p62 = scmp.ne.s32.totalorder %s53, %s54
      %p63 = scmp.eq.s32.totalorder %s22, 0
      %p64 = por %p62, %p63
      %p65 = scmp.ne.s32.totalorder %s53, %s54
      %p66 = scmp.eq.s32.totalorder %s23, 2
      %p67 = por %p65, %p66
      %p69 = scmp.ne.s32.totalorder %s54, %s68
      %p70 = scmp.eq.s32.totalorder %s23, 0
      %p71 = por %p69, %p70
      %s73 = sadd.s32 %s72, 1
      %p76 = scmp.eq.s32.totalorder %s17, 2
      %p77 = scmp.ne.s32.totalorder %s72, %s74
      %p78 = scmp.eq.s32.totalorder %s17, 0
      %p79 = por %p77, %p78
      %p80 = scmp.ne.s32.totalorder %s72, %s74
      %p81 = scmp.eq.s32.totalorder %s22, 2
      %p82 = por %p80, %p81
      %p83 = scmp.ne.s32.totalorder %s74, %s75
      %p84 = scmp.eq.s32.totalorder %s22, 0
      %p85 = por %p83, %p84
      %p86 = scmp.ne.s32.totalorder %s74, %s75
      %p87 = scmp.eq.s32.totalorder %s23, 2
      %p88 = por %p86, %p87
      %p90 = scmp.ne.s32.totalorder %s75, %s89
      %p91 = scmp.eq.s32.totalorder %s23, 0
      %p92 = por %p90, %p91
      %s93 = ssub.s32 %s17, %s24
      %p94 = scmp.eq.s32.totalorder %s93, 0
      %s96 = sadd.s32 %s95, 1
      %s97 = scalar_select %p94, %s95, %s96
      %p100 = pneg %p94
      %p101 = scmp.eq.s32.totalorder %s17, 2
      %p102 = por %p100, %p101
      %p103 = scmp.ne.s32.totalorder %s95, %s98
      %p104 = scmp.eq.s32.totalorder %s17, 0
      %p105 = por %p103, %p104
      %p106 = scmp.ne.s32.totalorder %s95, %s98
      %p107 = scmp.eq.s32.totalorder %s22, 2
      %p108 = por %p106, %p107
      %p109 = scmp.ne.s32.totalorder %s98, %s99
      %p110 = scmp.eq.s32.totalorder %s22, 0
      %p111 = por %p109, %p110
      %p112 = scmp.ne.s32.totalorder %s98, %s99
      %p113 = scmp.eq.s32.totalorder %s23, 2
      %p114 = por %p112, %p113
      %p116 = scmp.ne.s32.totalorder %s99, %s115
      %p117 = scmp.eq.s32.totalorder %s23, 0
      %p118 = por %p116, %p117
      %s119 = ssub.s32 %s17, %s24
      %p120 = scmp.eq.s32.totalorder %s119, 0
      %s122 = sadd.s32 %s121, 1
      %s123 = scalar_select %p120, %s121, %s122
      %p126 = pneg %p120
      %p127 = scmp.eq.s32.totalorder %s17, 2
      %p128 = por %p126, %p127
      %p129 = scmp.ne.s32.totalorder %s121, %s124
      %p130 = scmp.eq.s32.totalorder %s17, 0
      %p131 = por %p129, %p130
      %p132 = scmp.ne.s32.totalorder %s121, %s124
      %p133 = scmp.eq.s32.totalorder %s22, 2
      %p134 = por %p132, %p133
      %p135 = scmp.ne.s32.totalorder %s124, %s125
      %p136 = scmp.eq.s32.totalorder %s22, 0
      %p137 = por %p135, %p136
      %p138 = scmp.ne.s32.totalorder %s124, %s125
      %p139 = scmp.eq.s32.totalorder %s23, 2
      %p140 = por %p138, %p139
      %p142 = scmp.ne.s32.totalorder %s125, %s141
      %p143 = scmp.eq.s32.totalorder %s23, 0
      %p144 = por %p142, %p143
      %p145 = scmp.le.s32.totalorder 1, %s17
      %p146 = scmp.lt.s32.totalorder %s17, 4
      %p147 = pnand %p145, %p146
      %p148 = pneg %p147
      // Predicated region
      $region9: #{tpu_custom_call.1} parent=5 // pred_check
        _
      $region10: #{tpu_custom_call.1} parent=5 // pred_check_branch
        %150 = sbr.rel (%p147) target = $region12
      $region11: #{tpu_custom_call.1} parent=5 // pred_region
        %s151 = ssub.s32 %s17, 1
        // Predicated region
        $region13: #{tpu_custom_call.1} parent=11 // pred_check
          %p152 = pneg %p64
        $region14: #{tpu_custom_call.1} parent=11 // pred_check_branch
          %154 = sbr.rel (%p152) target = $region16
        $region15: #{tpu_custom_call.1} parent=11 // pred_region
          _
        $region16: #{tpu_custom_call.1} parent=11 // pred_fallthru
          _
        // Predicated region
        $region17: #{tpu_custom_call.1} parent=11 // pred_check
          %p155 = pneg %p85
        $region18: #{tpu_custom_call.1} parent=11 // pred_check_branch
          %157 = sbr.rel (%p155) target = $region20
        $region19: #{tpu_custom_call.1} parent=11 // pred_region
          _
        $region20: #{tpu_custom_call.1} parent=11 // pred_fallthru
          _
      $region12: #{tpu_custom_call.1} parent=5 // pred_fallthru
        _
      %p158 = scmp.lt.s32.totalorder %s17, 3
      // Predicated region
      $region21: #{tpu_custom_call.1} parent=5 // pred_check
        %p159 = pneg %p158
      $region22: #{tpu_custom_call.1} parent=5 // pred_check_branch
        %161 = sbr.rel (%p159) target = $region24
      $region23: #{tpu_custom_call.1} parent=5 // pred_region
        // Predicated region
        $region25: #{tpu_custom_call.1} parent=23 // pred_check
          %p162 = pneg %p37
        $region26: #{tpu_custom_call.1} parent=23 // pred_check_branch
          %164 = sbr.rel (%p162) target = $region28
        $region27: #{tpu_custom_call.1} parent=23 // pred_region
          %s165 = smul.u32 256, %s17
          %p166 = scmp.lt.s32.totalorder %s165, 767
          %s167 = scalar_select %p166, %s165, 767
          %s168 = smul.addr %s167, 8
          %s169 = scalar_lea.vmem %s0, %s168
          %s170 = smul.u32 256, %s17
        $region28: #{tpu_custom_call.1} parent=23 // pred_fallthru
          _
      $region24: #{tpu_custom_call.1} parent=5 // pred_fallthru
        _
      %p171 = scmp.le.s32.totalorder 1, %s17
      %p172 = scmp.lt.s32.totalorder %s17, 4
      %p173 = pnand %p171, %p172
      %p174 = pneg %p173
      // Predicated region
      $region29: #{tpu_custom_call.1} parent=5 // pred_check
        _
      $region30: #{tpu_custom_call.1} parent=5 // pred_check_branch
        %176 = sbr.rel (%p173) target = $region32
      $region31: #{tpu_custom_call.1} parent=5 // pred_region
        %s177 = ssub.s32 %s17, 1
        %s178 = smul.u32 256, %s22
        %p179 = scmp.lt.s32.totalorder %s178, 767
        %s180 = scalar_select %p179, %s178, 767
        %s181 = smul.addr %s180, 8
        %s182 = scalar_lea.vmem %s0, %s181
        %p183 = pneg %p43
        %p184 = pneg %p40
        %p185 = pneg %p64
        %p186 = pneg %p61
        %p187 = pneg %p85
        %p188 = pneg %p82
        %p189 = pneg %p111
        %p190 = pneg %p108
        %s191 = sand.u32 %s98, 1
        %s192 = scalar_lea.sflag [#allocation3], %s191
        %s193 = sand.u32 %s98, 1
        %s194 = smul.addr %s193, 16
        %s195 = scalar_lea.vmem [#allocation2], %s194
        %p196 = pneg %p137
        %p197 = pneg %p134
        %s198 = sand.u32 %s124, 1
        %s199 = scalar_lea.sflag [#allocation5], %s198
        %s200 = sand.u32 %s124, 1
        %s201 = smul.addr %s200, 16
        %s202 = scalar_lea.vmem [#allocation4], %s201
        %s203 = smul.u32 256, %s22
        %p204 = scmp.lt.s32.totalorder %s203, 767
        %s205 = scalar_select %p204, %s203, 767
        %s206 = smul.addr %s205, 8
        %s207 = scalar_lea.vmem %s0, %s206
        %s208 = smul.u32 256, %s22
        %s209 = smul.u32 16, %s22
        %s210 = smul.u32 16, %s22
        %v211 = vld [vmem:[%s1] sm:$0x3]
        %v212 = vld [vmem:[%s207] sm:$0xff]
        %v213 = vld [vmem:[%s207 + $0x8] sm:$0xff]
        %v214 = vld [vmem:[%s207 + $0x10] sm:$0xff]
        %v215 = vld [vmem:[%s207 + $0x18] sm:$0xff]
        %v216 = vld [vmem:[%s207 + $0x20] sm:$0xff]
        %v217 = vld [vmem:[%s207 + $0x28] sm:$0xff]
        %v218 = vld [vmem:[%s207 + $0x30] sm:$0xff]
        %v219 = vld [vmem:[%s207 + $0x38] sm:$0xff]
        %v220 = vld [vmem:[%s207 + $0x40] sm:$0xff]
        %v221 = vld [vmem:[%s207 + $0x48] sm:$0xff]
        %v222 = vld [vmem:[%s207 + $0x50] sm:$0xff]
        %v223 = vld [vmem:[%s207 + $0x58] sm:$0xff]
        %v224 = vld [vmem:[%s207 + $0x60] sm:$0xff]
        %v225 = vld [vmem:[%s207 + $0x68] sm:$0xff]
        %v226 = vld [vmem:[%s207 + $0x70] sm:$0xff]
        %v227 = vld [vmem:[%s207 + $0x78] sm:$0xff]
        %v228 = vld [vmem:[%s207 + $0x80] sm:$0xff]
        %v229 = vld [vmem:[%s207 + $0x88] sm:$0xff]
        %v230 = vld [vmem:[%s207 + $0x90] sm:$0xff]
        %v231 = vld [vmem:[%s207 + $0x98] sm:$0xff]
        %v232 = vld [vmem:[%s207 + $0xa0] sm:$0xff]
        %v233 = vld [vmem:[%s207 + $0xa8] sm:$0xff]
        %v234 = vld [vmem:[%s207 + $0xb0] sm:$0xff]
        %v235 = vld [vmem:[%s207 + $0xb8] sm:$0xff]
        %v236 = vld [vmem:[%s207 + $0xc0] sm:$0xff]
        %v237 = vld [vmem:[%s207 + $0xc8] sm:$0xff]
        %v238 = vld [vmem:[%s207 + $0xd0] sm:$0xff]
        %v239 = vld [vmem:[%s207 + $0xd8] sm:$0xff]
        %v240 = vld [vmem:[%s207 + $0xe0] sm:$0xff]
        %v241 = vld [vmem:[%s207 + $0xe8] sm:$0xff]
        %v242 = vld [vmem:[%s207 + $0xf0] sm:$0xff]
        %v243 = vld [vmem:[%s207 + $0xf8] sm:$0xff]
        %v244 = vld [vmem:[%s207 + $0x100] sm:$0xff]
        %v245 = vld [vmem:[%s207 + $0x108] sm:$0xff]
        %v246 = vld [vmem:[%s207 + $0x110] sm:$0xff]
        %v247 = vld [vmem:[%s207 + $0x118] sm:$0xff]
        %v248 = vld [vmem:[%s207 + $0x120] sm:$0xff]
        %v249 = vld [vmem:[%s207 + $0x128] sm:$0xff]
        %v250 = vld [vmem:[%s207 + $0x130] sm:$0xff]
        %v251 = vld [vmem:[%s207 + $0x138] sm:$0xff]
        %v252 = vld [vmem:[%s207 + $0x140] sm:$0xff]
        %v253 = vld [vmem:[%s207 + $0x148] sm:$0xff]
        %v254 = vld [vmem:[%s207 + $0x150] sm:$0xff]
        %v255 = vld [vmem:[%s207 + $0x158] sm:$0xff]
        %v256 = vld [vmem:[%s207 + $0x160] sm:$0xff]
        %v257 = vld [vmem:[%s207 + $0x168] sm:$0xff]
        %v258 = vld [vmem:[%s207 + $0x170] sm:$0xff]
        %v259 = vld [vmem:[%s207 + $0x178] sm:$0xff]
        %v260 = vld [vmem:[%s207 + $0x180] sm:$0xff]
        %v261 = vld [vmem:[%s207 + $0x188] sm:$0xff]
        %v262 = vld [vmem:[%s207 + $0x190] sm:$0xff]
        %v263 = vld [vmem:[%s207 + $0x198] sm:$0xff]
        %v264 = vld [vmem:[%s207 + $0x1a0] sm:$0xff]
        %v265 = vld [vmem:[%s207 + $0x1a8] sm:$0xff]
        %v266 = vld [vmem:[%s207 + $0x1b0] sm:$0xff]
        %v267 = vld [vmem:[%s207 + $0x1b8] sm:$0xff]
        %v268 = vld [vmem:[%s207 + $0x1c0] sm:$0xff]
        %v269 = vld [vmem:[%s207 + $0x1c8] sm:$0xff]
        %v270 = vld [vmem:[%s207 + $0x1d0] sm:$0xff]
        %v271 = vld [vmem:[%s207 + $0x1d8] sm:$0xff]
        %v272 = vld [vmem:[%s207 + $0x1e0] sm:$0xff]
        %v273 = vld [vmem:[%s207 + $0x1e8] sm:$0xff]
        %v274 = vld [vmem:[%s207 + $0x1f0] sm:$0xff]
        %v275 = vld [vmem:[%s207 + $0x1f8] sm:$0xff]
        %v276 = vld [vmem:[%s207 + $0x200] sm:$0xff]
        %v277 = vld [vmem:[%s207 + $0x208] sm:$0xff]
        %v278 = vld [vmem:[%s207 + $0x210] sm:$0xff]
        %v279 = vld [vmem:[%s207 + $0x218] sm:$0xff]
        %v280 = vld [vmem:[%s207 + $0x220] sm:$0xff]
        %v281 = vld [vmem:[%s207 + $0x228] sm:$0xff]
        %v282 = vld [vmem:[%s207 + $0x230] sm:$0xff]
        %v283 = vld [vmem:[%s207 + $0x238] sm:$0xff]
        %v284 = vld [vmem:[%s207 + $0x240] sm:$0xff]
        %v285 = vld [vmem:[%s207 + $0x248] sm:$0xff]
        %v286 = vld [vmem:[%s207 + $0x250] sm:$0xff]
        %v287 = vld [vmem:[%s207 + $0x258] sm:$0xff]
        %v288 = vld [vmem:[%s207 + $0x260] sm:$0xff]
        %v289 = vld [vmem:[%s207 + $0x268] sm:$0xff]
        %v290 = vld [vmem:[%s207 + $0x270] sm:$0xff]
        %v291 = vld [vmem:[%s207 + $0x278] sm:$0xff]
        %v292 = vld [vmem:[%s207 + $0x280] sm:$0xff]
        %v293 = vld [vmem:[%s207 + $0x288] sm:$0xff]
        %v294 = vld [vmem:[%s207 + $0x290] sm:$0xff]
        %v295 = vld [vmem:[%s207 + $0x298] sm:$0xff]
        %v296 = vld [vmem:[%s207 + $0x2a0] sm:$0xff]
        %v297 = vld [vmem:[%s207 + $0x2a8] sm:$0xff]
        %v298 = vld [vmem:[%s207 + $0x2b0] sm:$0xff]
        %v299 = vld [vmem:[%s207 + $0x2b8] sm:$0xff]
        %v300 = vld [vmem:[%s207 + $0x2c0] sm:$0xff]
        %v301 = vld [vmem:[%s207 + $0x2c8] sm:$0xff]
        %v302 = vld [vmem:[%s207 + $0x2d0] sm:$0xff]
        %v303 = vld [vmem:[%s207 + $0x2d8] sm:$0xff]
        %v304 = vld [vmem:[%s207 + $0x2e0] sm:$0xff]
        %v305 = vld [vmem:[%s207 + $0x2e8] sm:$0xff]
        %v306 = vld [vmem:[%s207 + $0x2f0] sm:$0xff]
        %v307 = vld [vmem:[%s207 + $0x2f8] sm:$0xff]
        %v308 = vld [vmem:[%s207 + $0x300] sm:$0xff]
        %v309 = vld [vmem:[%s207 + $0x308] sm:$0xff]
        %v310 = vld [vmem:[%s207 + $0x310] sm:$0xff]
        %v311 = vld [vmem:[%s207 + $0x318] sm:$0xff]
        %v312 = vld [vmem:[%s207 + $0x320] sm:$0xff]
        %v313 = vld [vmem:[%s207 + $0x328] sm:$0xff]
        %v314 = vld [vmem:[%s207 + $0x330] sm:$0xff]
        %v315 = vld [vmem:[%s207 + $0x338] sm:$0xff]
        %v316 = vld [vmem:[%s207 + $0x340] sm:$0xff]
        %v317 = vld [vmem:[%s207 + $0x348] sm:$0xff]
        %v318 = vld [vmem:[%s207 + $0x350] sm:$0xff]
        %v319 = vld [vmem:[%s207 + $0x358] sm:$0xff]
        %v320 = vld [vmem:[%s207 + $0x360] sm:$0xff]
        %v321 = vld [vmem:[%s207 + $0x368] sm:$0xff]
        %v322 = vld [vmem:[%s207 + $0x370] sm:$0xff]
        %v323 = vld [vmem:[%s207 + $0x378] sm:$0xff]
        %v324 = vld [vmem:[%s207 + $0x380] sm:$0xff]
        %v325 = vld [vmem:[%s207 + $0x388] sm:$0xff]
        %v326 = vld [vmem:[%s207 + $0x390] sm:$0xff]
        %v327 = vld [vmem:[%s207 + $0x398] sm:$0xff]
        %v328 = vld [vmem:[%s207 + $0x3a0] sm:$0xff]
        %v329 = vld [vmem:[%s207 + $0x3a8] sm:$0xff]
        %v330 = vld [vmem:[%s207 + $0x3b0] sm:$0xff]
        %v331 = vld [vmem:[%s207 + $0x3b8] sm:$0xff]
        %v332 = vld [vmem:[%s207 + $0x3c0] sm:$0xff]
        %v333 = vld [vmem:[%s207 + $0x3c8] sm:$0xff]
        %v334 = vld [vmem:[%s207 + $0x3d0] sm:$0xff]
        %v335 = vld [vmem:[%s207 + $0x3d8] sm:$0xff]
        %v336 = vld [vmem:[%s207 + $0x3e0] sm:$0xff]
        %v337 = vld [vmem:[%s207 + $0x3e8] sm:$0xff]
        %v338 = vld [vmem:[%s207 + $0x3f0] sm:$0xff]
        %v339 = vld [vmem:[%s207 + $0x3f8] sm:$0xff]
        %v340 = vld [vmem:[%s207 + $0x400] sm:$0xff]
        %v341 = vld [vmem:[%s207 + $0x408] sm:$0xff]
        %v342 = vld [vmem:[%s207 + $0x410] sm:$0xff]
        %v343 = vld [vmem:[%s207 + $0x418] sm:$0xff]
        %v344 = vld [vmem:[%s207 + $0x420] sm:$0xff]
        %v345 = vld [vmem:[%s207 + $0x428] sm:$0xff]
        %v346 = vld [vmem:[%s207 + $0x430] sm:$0xff]
        %v347 = vld [vmem:[%s207 + $0x438] sm:$0xff]
        %v348 = vld [vmem:[%s207 + $0x440] sm:$0xff]
        %v349 = vld [vmem:[%s207 + $0x448] sm:$0xff]
        %v350 = vld [vmem:[%s207 + $0x450] sm:$0xff]
        %v351 = vld [vmem:[%s207 + $0x458] sm:$0xff]
        %v352 = vld [vmem:[%s207 + $0x460] sm:$0xff]
        %v353 = vld [vmem:[%s207 + $0x468] sm:$0xff]
        %v354 = vld [vmem:[%s207 + $0x470] sm:$0xff]
        %v355 = vld [vmem:[%s207 + $0x478] sm:$0xff]
        %v356 = vld [vmem:[%s207 + $0x480] sm:$0xff]
        %v357 = vld [vmem:[%s207 + $0x488] sm:$0xff]
        %v358 = vld [vmem:[%s207 + $0x490] sm:$0xff]
        %v359 = vld [vmem:[%s207 + $0x498] sm:$0xff]
        %v360 = vld [vmem:[%s207 + $0x4a0] sm:$0xff]
        %v361 = vld [vmem:[%s207 + $0x4a8] sm:$0xff]
        %v362 = vld [vmem:[%s207 + $0x4b0] sm:$0xff]
        %v363 = vld [vmem:[%s207 + $0x4b8] sm:$0xff]
        %v364 = vld [vmem:[%s207 + $0x4c0] sm:$0xff]
        %v365 = vld [vmem:[%s207 + $0x4c8] sm:$0xff]
        %v366 = vld [vmem:[%s207 + $0x4d0] sm:$0xff]
        %v367 = vld [vmem:[%s207 + $0x4d8] sm:$0xff]
        %v368 = vld [vmem:[%s207 + $0x4e0] sm:$0xff]
        %v369 = vld [vmem:[%s207 + $0x4e8] sm:$0xff]
        %v370 = vld [vmem:[%s207 + $0x4f0] sm:$0xff]
        %v371 = vld [vmem:[%s207 + $0x4f8] sm:$0xff]
        %v372 = vld [vmem:[%s207 + $0x500] sm:$0xff]
        %v373 = vld [vmem:[%s207 + $0x508] sm:$0xff]
        %v374 = vld [vmem:[%s207 + $0x510] sm:$0xff]
        %v375 = vld [vmem:[%s207 + $0x518] sm:$0xff]
        %v376 = vld [vmem:[%s207 + $0x520] sm:$0xff]
        %v377 = vld [vmem:[%s207 + $0x528] sm:$0xff]
        %v378 = vld [vmem:[%s207 + $0x530] sm:$0xff]
        %v379 = vld [vmem:[%s207 + $0x538] sm:$0xff]
        %v380 = vld [vmem:[%s207 + $0x540] sm:$0xff]
        %v381 = vld [vmem:[%s207 + $0x548] sm:$0xff]
        %v382 = vld [vmem:[%s207 + $0x550] sm:$0xff]
        %v383 = vld [vmem:[%s207 + $0x558] sm:$0xff]
        %v384 = vld [vmem:[%s207 + $0x560] sm:$0xff]
        %v385 = vld [vmem:[%s207 + $0x568] sm:$0xff]
        %v386 = vld [vmem:[%s207 + $0x570] sm:$0xff]
        %v387 = vld [vmem:[%s207 + $0x578] sm:$0xff]
        %v388 = vld [vmem:[%s207 + $0x580] sm:$0xff]
        %v389 = vld [vmem:[%s207 + $0x588] sm:$0xff]
        %v390 = vld [vmem:[%s207 + $0x590] sm:$0xff]
        %v391 = vld [vmem:[%s207 + $0x598] sm:$0xff]
        %v392 = vld [vmem:[%s207 + $0x5a0] sm:$0xff]
        %v393 = vld [vmem:[%s207 + $0x5a8] sm:$0xff]
        %v394 = vld [vmem:[%s207 + $0x5b0] sm:$0xff]
        %v395 = vld [vmem:[%s207 + $0x5b8] sm:$0xff]
        %v396 = vld [vmem:[%s207 + $0x5c0] sm:$0xff]
        %v397 = vld [vmem:[%s207 + $0x5c8] sm:$0xff]
        %v398 = vld [vmem:[%s207 + $0x5d0] sm:$0xff]
        %v399 = vld [vmem:[%s207 + $0x5d8] sm:$0xff]
        %v400 = vld [vmem:[%s207 + $0x5e0] sm:$0xff]
        %v401 = vld [vmem:[%s207 + $0x5e8] sm:$0xff]
        %v402 = vld [vmem:[%s207 + $0x5f0] sm:$0xff]
        %v403 = vld [vmem:[%s207 + $0x5f8] sm:$0xff]
        %v404 = vld [vmem:[%s207 + $0x600] sm:$0xff]
        %v405 = vld [vmem:[%s207 + $0x608] sm:$0xff]
        %v406 = vld [vmem:[%s207 + $0x610] sm:$0xff]
        %v407 = vld [vmem:[%s207 + $0x618] sm:$0xff]
        %v408 = vld [vmem:[%s207 + $0x620] sm:$0xff]
        %v409 = vld [vmem:[%s207 + $0x628] sm:$0xff]
        %v410 = vld [vmem:[%s207 + $0x630] sm:$0xff]
        %v411 = vld [vmem:[%s207 + $0x638] sm:$0xff]
        %v412 = vld [vmem:[%s207 + $0x640] sm:$0xff]
        %v413 = vld [vmem:[%s207 + $0x648] sm:$0xff]
        %v414 = vld [vmem:[%s207 + $0x650] sm:$0xff]
        %v415 = vld [vmem:[%s207 + $0x658] sm:$0xff]
        %v416 = vld [vmem:[%s207 + $0x660] sm:$0xff]
        %v417 = vld [vmem:[%s207 + $0x668] sm:$0xff]
        %v418 = vld [vmem:[%s207 + $0x670] sm:$0xff]
        %v419 = vld [vmem:[%s207 + $0x678] sm:$0xff]
        %v420 = vld [vmem:[%s207 + $0x680] sm:$0xff]
        %v421 = vld [vmem:[%s207 + $0x688] sm:$0xff]
        %v422 = vld [vmem:[%s207 + $0x690] sm:$0xff]
        %v423 = vld [vmem:[%s207 + $0x698] sm:$0xff]
        %v424 = vld [vmem:[%s207 + $0x6a0] sm:$0xff]
        %v425 = vld [vmem:[%s207 + $0x6a8] sm:$0xff]
        %v426 = vld [vmem:[%s207 + $0x6b0] sm:$0xff]
        %v427 = vld [vmem:[%s207 + $0x6b8] sm:$0xff]
        %v428 = vld [vmem:[%s207 + $0x6c0] sm:$0xff]
        %v429 = vld [vmem:[%s207 + $0x6c8] sm:$0xff]
        %v430 = vld [vmem:[%s207 + $0x6d0] sm:$0xff]
        %v431 = vld [vmem:[%s207 + $0x6d8] sm:$0xff]
        %v432 = vld [vmem:[%s207 + $0x6e0] sm:$0xff]
        %v433 = vld [vmem:[%s207 + $0x6e8] sm:$0xff]
        %v434 = vld [vmem:[%s207 + $0x6f0] sm:$0xff]
        %v435 = vld [vmem:[%s207 + $0x6f8] sm:$0xff]
        %v436 = vld [vmem:[%s207 + $0x700] sm:$0xff]
        %v437 = vld [vmem:[%s207 + $0x708] sm:$0xff]
        %v438 = vld [vmem:[%s207 + $0x710] sm:$0xff]
        %v439 = vld [vmem:[%s207 + $0x718] sm:$0xff]
        %v440 = vld [vmem:[%s207 + $0x720] sm:$0xff]
        %v441 = vld [vmem:[%s207 + $0x728] sm:$0xff]
        %v442 = vld [vmem:[%s207 + $0x730] sm:$0xff]
        %v443 = vld [vmem:[%s207 + $0x738] sm:$0xff]
        %v444 = vld [vmem:[%s207 + $0x740] sm:$0xff]
        %v445 = vld [vmem:[%s207 + $0x748] sm:$0xff]
        %v446 = vld [vmem:[%s207 + $0x750] sm:$0xff]
        %v447 = vld [vmem:[%s207 + $0x758] sm:$0xff]
        %v448 = vld [vmem:[%s207 + $0x760] sm:$0xff]
        %v449 = vld [vmem:[%s207 + $0x768] sm:$0xff]
        %v450 = vld [vmem:[%s207 + $0x770] sm:$0xff]
        %v451 = vld [vmem:[%s207 + $0x778] sm:$0xff]
        %v452 = vld [vmem:[%s207 + $0x780] sm:$0xff]
        %v453 = vld [vmem:[%s207 + $0x788] sm:$0xff]
        %v454 = vld [vmem:[%s207 + $0x790] sm:$0xff]
        %v455 = vld [vmem:[%s207 + $0x798] sm:$0xff]
        %v456 = vld [vmem:[%s207 + $0x7a0] sm:$0xff]
        %v457 = vld [vmem:[%s207 + $0x7a8] sm:$0xff]
        %v458 = vld [vmem:[%s207 + $0x7b0] sm:$0xff]
        %v459 = vld [vmem:[%s207 + $0x7b8] sm:$0xff]
        %v460 = vld [vmem:[%s207 + $0x7c0] sm:$0xff]
        %v461 = vld [vmem:[%s207 + $0x7c8] sm:$0xff]
        %v462 = vld [vmem:[%s207 + $0x7d0] sm:$0xff]
        %v463 = vld [vmem:[%s207 + $0x7d8] sm:$0xff]
        %v464 = vld [vmem:[%s207 + $0x7e0] sm:$0xff]
        %v465 = vld [vmem:[%s207 + $0x7e8] sm:$0xff]
        %v466 = vld [vmem:[%s207 + $0x7f0] sm:$0xff]
        %v467 = vld [vmem:[%s207 + $0x7f8] sm:$0xff]
        %v468 = vld [vmem:[%s2] sm:$0x3]
        %470 = vset.pattern.permute.xlu0 0
        %471 = vperm.xlu0 %470, %v468
        %v472 = vpop.permute.xlu0 %471
        %vm474 = vcmask 48128
        %v476 = vsel %vm474, %v211, 0
        %v479 = vsel %vm474, %v212, 0
        %v482 = vsel %vm474, %v213, 0
        %v485 = vsel %vm474, %v214, 0
        %v488 = vsel %vm474, %v215, 0
        %v491 = vsel %vm474, %v216, 0
        %v494 = vsel %vm474, %v217, 0
        %v497 = vsel %vm474, %v218, 0
        %v500 = vsel %vm474, %v219, 0
        %v503 = vsel %vm474, %v220, 0
        %v506 = vsel %vm474, %v221, 0
        %v509 = vsel %vm474, %v222, 0
        %v512 = vsel %vm474, %v223, 0
        %v515 = vsel %vm474, %v224, 0
        %v518 = vsel %vm474, %v225, 0
        %v521 = vsel %vm474, %v226, 0
        %v524 = vsel %vm474, %v227, 0
        %v527 = vsel %vm474, %v228, 0
        %v530 = vsel %vm474, %v229, 0
        %v533 = vsel %vm474, %v230, 0
        %v536 = vsel %vm474, %v231, 0
        %v539 = vsel %vm474, %v232, 0
        %v542 = vsel %vm474, %v233, 0
        %v545 = vsel %vm474, %v234, 0
        %v548 = vsel %vm474, %v235, 0
        %v551 = vsel %vm474, %v236, 0
        %v554 = vsel %vm474, %v237, 0
        %v557 = vsel %vm474, %v238, 0
        %v560 = vsel %vm474, %v239, 0
        %v563 = vsel %vm474, %v240, 0
        %v566 = vsel %vm474, %v241, 0
        %v569 = vsel %vm474, %v242, 0
        %v572 = vsel %vm474, %v243, 0
        %v575 = vsel %vm474, %v244, 0
        %v578 = vsel %vm474, %v245, 0
        %v581 = vsel %vm474, %v246, 0
        %v584 = vsel %vm474, %v247, 0
        %v587 = vsel %vm474, %v248, 0
        %v590 = vsel %vm474, %v249, 0
        %v593 = vsel %vm474, %v250, 0
        %v596 = vsel %vm474, %v251, 0
        %v599 = vsel %vm474, %v252, 0
        %v602 = vsel %vm474, %v253, 0
        %v605 = vsel %vm474, %v254, 0
        %v608 = vsel %vm474, %v255, 0
        %v611 = vsel %vm474, %v256, 0
        %v614 = vsel %vm474, %v257, 0
        %v617 = vsel %vm474, %v258, 0
        %v620 = vsel %vm474, %v259, 0
        %v623 = vsel %vm474, %v260, 0
        %v626 = vsel %vm474, %v261, 0
        %v629 = vsel %vm474, %v262, 0
        %v632 = vsel %vm474, %v263, 0
        %v635 = vsel %vm474, %v264, 0
        %v638 = vsel %vm474, %v265, 0
        %v641 = vsel %vm474, %v266, 0
        %v644 = vsel %vm474, %v267, 0
        %v647 = vsel %vm474, %v268, 0
        %v650 = vsel %vm474, %v269, 0
        %v653 = vsel %vm474, %v270, 0
        %v656 = vsel %vm474, %v271, 0
        %v659 = vsel %vm474, %v272, 0
        %v662 = vsel %vm474, %v273, 0
        %v665 = vsel %vm474, %v274, 0
        %v668 = vsel %vm474, %v275, 0
        %v671 = vsel %vm474, %v276, 0
        %v674 = vsel %vm474, %v277, 0
        %v677 = vsel %vm474, %v278, 0
        %v680 = vsel %vm474, %v279, 0
        %v683 = vsel %vm474, %v280, 0
        %v686 = vsel %vm474, %v281, 0
        %v689 = vsel %vm474, %v282, 0
        %v692 = vsel %vm474, %v283, 0
        %v695 = vsel %vm474, %v284, 0
        %v698 = vsel %vm474, %v285, 0
        %v701 = vsel %vm474, %v286, 0
        %v704 = vsel %vm474, %v287, 0
        %v707 = vsel %vm474, %v288, 0
        %v710 = vsel %vm474, %v289, 0
        %v713 = vsel %vm474, %v290, 0
        %v716 = vsel %vm474, %v291, 0
        %v719 = vsel %vm474, %v292, 0
        %v722 = vsel %vm474, %v293, 0
        %v725 = vsel %vm474, %v294, 0
        %v728 = vsel %vm474, %v295, 0
        %v731 = vsel %vm474, %v296, 0
        %v734 = vsel %vm474, %v297, 0
        %v737 = vsel %vm474, %v298, 0
        %v740 = vsel %vm474, %v299, 0
        %v743 = vsel %vm474, %v300, 0
        %v746 = vsel %vm474, %v301, 0
        %v749 = vsel %vm474, %v302, 0
        %v752 = vsel %vm474, %v303, 0
        %v755 = vsel %vm474, %v304, 0
        %v758 = vsel %vm474, %v305, 0
        %v761 = vsel %vm474, %v306, 0
        %v764 = vsel %vm474, %v307, 0
        %v767 = vsel %vm474, %v308, 0
        %v770 = vsel %vm474, %v309, 0
        %v773 = vsel %vm474, %v310, 0
        %v776 = vsel %vm474, %v311, 0
        %v779 = vsel %vm474, %v312, 0
        %v782 = vsel %vm474, %v313, 0
        %v785 = vsel %vm474, %v314, 0
        %v788 = vsel %vm474, %v315, 0
        %v791 = vsel %vm474, %v316, 0
        %v794 = vsel %vm474, %v317, 0
        %v797 = vsel %vm474, %v318, 0
        %v800 = vsel %vm474, %v319, 0
        %v803 = vsel %vm474, %v320, 0
        %v806 = vsel %vm474, %v321, 0
        %v809 = vsel %vm474, %v322, 0
        %v812 = vsel %vm474, %v323, 0
        %v815 = vsel %vm474, %v324, 0
        %v818 = vsel %vm474, %v325, 0
        %v821 = vsel %vm474, %v326, 0
        %v824 = vsel %vm474, %v327, 0
        %v827 = vsel %vm474, %v328, 0
        %v830 = vsel %vm474, %v329, 0
        %v833 = vsel %vm474, %v330, 0
        %v836 = vsel %vm474, %v331, 0
        %v839 = vsel %vm474, %v332, 0
        %v842 = vsel %vm474, %v333, 0
        %v845 = vsel %vm474, %v334, 0
        %v848 = vsel %vm474, %v335, 0
        %v851 = vsel %vm474, %v336, 0
        %v854 = vsel %vm474, %v337, 0
        %v857 = vsel %vm474, %v338, 0
        %v860 = vsel %vm474, %v339, 0
        %v863 = vsel %vm474, %v340, 0
        %v866 = vsel %vm474, %v341, 0
        %v869 = vsel %vm474, %v342, 0
        %v872 = vsel %vm474, %v343, 0
        %v875 = vsel %vm474, %v344, 0
        %v878 = vsel %vm474, %v345, 0
        %v881 = vsel %vm474, %v346, 0
        %v884 = vsel %vm474, %v347, 0
        %v887 = vsel %vm474, %v348, 0
        %v890 = vsel %vm474, %v349, 0
        %v893 = vsel %vm474, %v350, 0
        %v896 = vsel %vm474, %v351, 0
        %v899 = vsel %vm474, %v352, 0
        %v902 = vsel %vm474, %v353, 0
        %v905 = vsel %vm474, %v354, 0
        %v908 = vsel %vm474, %v355, 0
        %v911 = vsel %vm474, %v356, 0
        %v914 = vsel %vm474, %v357, 0
        %v917 = vsel %vm474, %v358, 0
        %v920 = vsel %vm474, %v359, 0
        %v923 = vsel %vm474, %v360, 0
        %v926 = vsel %vm474, %v361, 0
        %v929 = vsel %vm474, %v362, 0
        %v932 = vsel %vm474, %v363, 0
        %v935 = vsel %vm474, %v364, 0
        %v938 = vsel %vm474, %v365, 0
        %v941 = vsel %vm474, %v366, 0
        %v944 = vsel %vm474, %v367, 0
        %v947 = vsel %vm474, %v368, 0
        %v950 = vsel %vm474, %v369, 0
        %v953 = vsel %vm474, %v370, 0
        %v956 = vsel %vm474, %v371, 0
        %v959 = vsel %vm474, %v372, 0
        %v962 = vsel %vm474, %v373, 0
        %v965 = vsel %vm474, %v374, 0
        %v968 = vsel %vm474, %v375, 0
        %v971 = vsel %vm474, %v376, 0
        %v974 = vsel %vm474, %v377, 0
        %v977 = vsel %vm474, %v378, 0
        %v980 = vsel %vm474, %v379, 0
        %v983 = vsel %vm474, %v380, 0
        %v986 = vsel %vm474, %v381, 0
        %v989 = vsel %vm474, %v382, 0
        %v992 = vsel %vm474, %v383, 0
        %v995 = vsel %vm474, %v384, 0
        %v998 = vsel %vm474, %v385, 0
        %v1001 = vsel %vm474, %v386, 0
        %v1004 = vsel %vm474, %v387, 0
        %v1007 = vsel %vm474, %v388, 0
        %v1010 = vsel %vm474, %v389, 0
        %v1013 = vsel %vm474, %v390, 0
        %v1016 = vsel %vm474, %v391, 0
        %v1019 = vsel %vm474, %v392, 0
        %v1022 = vsel %vm474, %v393, 0
        %v1025 = vsel %vm474, %v394, 0
        %v1028 = vsel %vm474, %v395, 0
        %v1031 = vsel %vm474, %v396, 0
        %v1034 = vsel %vm474, %v397, 0
        %v1037 = vsel %vm474, %v398, 0
        %v1040 = vsel %vm474, %v399, 0
        %v1043 = vsel %vm474, %v400, 0
        %v1046 = vsel %vm474, %v401, 0
        %v1049 = vsel %vm474, %v402, 0
        %v1052 = vsel %vm474, %v403, 0
        %v1055 = vsel %vm474, %v404, 0
        %v1058 = vsel %vm474, %v405, 0
        %v1061 = vsel %vm474, %v406, 0
        %v1064 = vsel %vm474, %v407, 0
        %v1067 = vsel %vm474, %v408, 0
        %v1070 = vsel %vm474, %v409, 0
        %v1073 = vsel %vm474, %v410, 0
        %v1076 = vsel %vm474, %v411, 0
        %v1079 = vsel %vm474, %v412, 0
        %v1082 = vsel %vm474, %v413, 0
        %v1085 = vsel %vm474, %v414, 0
        %v1088 = vsel %vm474, %v415, 0
        %v1091 = vsel %vm474, %v416, 0
        %v1094 = vsel %vm474, %v417, 0
        %v1097 = vsel %vm474, %v418, 0
        %v1100 = vsel %vm474, %v419, 0
        %v1103 = vsel %vm474, %v420, 0
        %v1106 = vsel %vm474, %v421, 0
        %v1109 = vsel %vm474, %v422, 0
        %v1112 = vsel %vm474, %v423, 0
        %v1115 = vsel %vm474, %v424, 0
        %v1118 = vsel %vm474, %v425, 0
        %v1121 = vsel %vm474, %v426, 0
        %v1124 = vsel %vm474, %v427, 0
        %v1127 = vsel %vm474, %v428, 0
        %v1130 = vsel %vm474, %v429, 0
        %v1133 = vsel %vm474, %v430, 0
        %v1136 = vsel %vm474, %v431, 0
        %v1139 = vsel %vm474, %v432, 0
        %v1142 = vsel %vm474, %v433, 0
        %v1145 = vsel %vm474, %v434, 0
        %v1148 = vsel %vm474, %v435, 0
        %v1151 = vsel %vm474, %v436, 0
        %v1154 = vsel %vm474, %v437, 0
        %v1157 = vsel %vm474, %v438, 0
        %v1160 = vsel %vm474, %v439, 0
        %v1163 = vsel %vm474, %v440, 0
        %v1166 = vsel %vm474, %v441, 0
        %v1169 = vsel %vm474, %v442, 0
        %v1172 = vsel %vm474, %v443, 0
        %v1175 = vsel %vm474, %v444, 0
        %v1178 = vsel %vm474, %v445, 0
        %v1181 = vsel %vm474, %v446, 0
        %v1184 = vsel %vm474, %v447, 0
        %v1187 = vsel %vm474, %v448, 0
        %v1190 = vsel %vm474, %v449, 0
        %v1193 = vsel %vm474, %v450, 0
        %v1196 = vsel %vm474, %v451, 0
        %v1199 = vsel %vm474, %v452, 0
        %v1202 = vsel %vm474, %v453, 0
        %v1205 = vsel %vm474, %v454, 0
        %v1208 = vsel %vm474, %v455, 0
        %v1211 = vsel %vm474, %v456, 0
        %v1214 = vsel %vm474, %v457, 0
        %v1217 = vsel %vm474, %v458, 0
        %v1220 = vsel %vm474, %v459, 0
        %v1223 = vsel %vm474, %v460, 0
        %v1226 = vsel %vm474, %v461, 0
        %v1229 = vsel %vm474, %v462, 0
        %v1232 = vsel %vm474, %v463, 0
        %v1235 = vsel %vm474, %v464, 0
        %v1238 = vsel %vm474, %v465, 0
        %v1241 = vsel %vm474, %v466, 0
        %v1244 = vsel %vm474, %v467, 0
        %1246 = vmatprep.subr.mxu0 0.0
        %1247 = vmatpush1.xpose.msra.mxu0 %v524
        %1248 = vmatprep.subr.mxu0 0.0
        %1249 = vmatpush1.xpose.msra.mxu0 %v521
        %1250 = vmatprep.subr.mxu0 0.0
        %1251 = vmatpush1.xpose.msra.mxu0 %v518
        %1252 = vmatprep.subr.mxu0 0.0
        %1253 = vmatpush1.xpose.msra.mxu0 %v515
        %1254 = vmatprep.subr.mxu0 0.0
        %1255 = vmatpush1.xpose.msra.mxu0 %v512
        %1256 = vmatprep.subr.mxu0 0.0
        %1257 = vmatpush1.xpose.msra.mxu0 %v509
        %1258 = vmatprep.subr.mxu0 0.0
        %1259 = vmatpush1.xpose.msra.mxu0 %v506
        %1260 = vmatprep.subr.mxu0 0.0
        %1261 = vmatpush1.xpose.msra.mxu0 %v503
        %1262 = vmatprep.subr.mxu0 0.0
        %1263 = vmatpush1.xpose.msra.mxu0 %v500
        %1264 = vmatprep.subr.mxu0 0.0
        %1265 = vmatpush1.xpose.msra.mxu0 %v497
        %1266 = vmatprep.subr.mxu0 0.0
        %1267 = vmatpush1.xpose.msra.mxu0 %v494
        %1268 = vmatprep.subr.mxu0 0.0
        %1269 = vmatpush1.xpose.msra.mxu0 %v491
        %1270 = vmatprep.subr.mxu0 0.0
        %1271 = vmatpush1.xpose.msra.mxu0 %v488
        %1272 = vmatprep.subr.mxu0 0.0
        %1273 = vmatpush1.xpose.msra.mxu0 %v485
        %1274 = vmatprep.subr.mxu0 0.0
        %1275 = vmatpush1.xpose.msra.mxu0 %v482
        %1276 = vmatprep.subr.mxu0 0.0
        %1277 = vmatpush1.xpose.msra.mxu0 %v479
        %1278 = vmatprep.subr.mxu0 0.0
        %1279 = vmatpush2.xpose.msra.mxu0 %v572
        %1280 = vmatprep.subr.mxu0 0.0
        %1281 = vmatpush2.xpose.msra.mxu0 %v569
        %1282 = vmatprep.subr.mxu0 0.0
        %1283 = vmatpush2.xpose.msra.mxu0 %v566
        %1284 = vmatprep.subr.mxu0 0.0
        %1285 = vmatpush2.xpose.msra.mxu0 %v563
        %1286 = vmatprep.subr.mxu0 0.0
        %1287 = vmatpush2.xpose.msra.mxu0 %v560
        %1288 = vmatprep.subr.mxu0 0.0
        %1289 = vmatpush2.xpose.msra.mxu0 %v557
        %1290 = vmatprep.subr.mxu0 0.0
        %1291 = vmatpush2.xpose.msra.mxu0 %v554
        %1292 = vmatprep.subr.mxu0 0.0
        %1293 = vmatpush2.xpose.msra.mxu0 %v551
        %1294 = vmatprep.subr.mxu0 0.0
        %1295 = vmatpush2.xpose.msra.mxu0 %v548
        %1296 = vmatprep.subr.mxu0 0.0
        %1297 = vmatpush2.xpose.msra.mxu0 %v545
        %1298 = vmatprep.subr.mxu0 0.0
        %1299 = vmatpush2.xpose.msra.mxu0 %v542
        %1300 = vmatprep.subr.mxu0 0.0
        %1301 = vmatpush2.xpose.msra.mxu0 %v539
        %1302 = vmatprep.subr.mxu0 0.0
        %1303 = vmatpush2.xpose.msra.mxu0 %v536
        %1304 = vmatprep.subr.mxu0 0.0
        %1305 = vmatpush2.xpose.msra.mxu0 %v533
        %1306 = vmatprep.subr.mxu0 0.0
        %1307 = vmatpush2.xpose.msra.mxu0 %v530
        %1308 = vmatprep.subr.mxu0 0.0
        %1309 = vmatpush2.xpose.msra.mxu0 %v527
        %1310 = vmatprep.mubr.f32.mxu0 0.0
        %1311 = vmatmul.mubr.f32.gmra.mxu0 %v476
        %v1312 = vpop.f32.mrf.mxu0
        %v1313 = vadd.f32 %v472, %v1312
        %v1314 = vpop.f32.mrf.mxu0
        %v1315 = vadd.f32 %v472, %v1314
        %1316 = vdwg.mxu0
        %1317 = vmatprep.subr.mxu0 0.0
        %1318 = vmatpush1.xpose.msra.mxu0 %v620
        %1319 = vmatprep.subr.mxu0 0.0
        %1320 = vmatpush1.xpose.msra.mxu0 %v617
        %1321 = vmatprep.subr.mxu0 0.0
        %1322 = vmatpush1.xpose.msra.mxu0 %v614
        %1323 = vmatprep.subr.mxu0 0.0
        %1324 = vmatpush1.xpose.msra.mxu0 %v611
        %1325 = vmatprep.subr.mxu0 0.0
        %1326 = vmatpush1.xpose.msra.mxu0 %v608
        %1327 = vmatprep.subr.mxu0 0.0
        %1328 = vmatpush1.xpose.msra.mxu0 %v605
        %1329 = vmatprep.subr.mxu0 0.0
        %1330 = vmatpush1.xpose.msra.mxu0 %v602
        %1331 = vmatprep.subr.mxu0 0.0
        %1332 = vmatpush1.xpose.msra.mxu0 %v599
        %1333 = vmatprep.subr.mxu0 0.0
        %1334 = vmatpush1.xpose.msra.mxu0 %v596
        %1335 = vmatprep.subr.mxu0 0.0
        %1336 = vmatpush1.xpose.msra.mxu0 %v593
        %1337 = vmatprep.subr.mxu0 0.0
        %1338 = vmatpush1.xpose.msra.mxu0 %v590
        %1339 = vmatprep.subr.mxu0 0.0
        %1340 = vmatpush1.xpose.msra.mxu0 %v587
        %1341 = vmatprep.subr.mxu0 0.0
        %1342 = vmatpush1.xpose.msra.mxu0 %v584
        %1343 = vmatprep.subr.mxu0 0.0
        %1344 = vmatpush1.xpose.msra.mxu0 %v581
        %1345 = vmatprep.subr.mxu0 0.0
        %1346 = vmatpush1.xpose.msra.mxu0 %v578
        %1347 = vmatprep.subr.mxu0 0.0
        %1348 = vmatpush1.xpose.msra.mxu0 %v575
        %1349 = vmatprep.subr.mxu0 0.0
        %1350 = vmatpush2.xpose.msra.mxu0 %v668
        %1351 = vmatprep.subr.mxu0 0.0
        %1352 = vmatpush2.xpose.msra.mxu0 %v665
        %1353 = vmatprep.subr.mxu0 0.0
        %1354 = vmatpush2.xpose.msra.mxu0 %v662
        %1355 = vmatprep.subr.mxu0 0.0
        %1356 = vmatpush2.xpose.msra.mxu0 %v659
        %1357 = vmatprep.subr.mxu0 0.0
        %1358 = vmatpush2.xpose.msra.mxu0 %v656
        %1359 = vmatprep.subr.mxu0 0.0
        %1360 = vmatpush2.xpose.msra.mxu0 %v653
        %1361 = vmatprep.subr.mxu0 0.0
        %1362 = vmatpush2.xpose.msra.mxu0 %v650
        %1363 = vmatprep.subr.mxu0 0.0
        %1364 = vmatpush2.xpose.msra.mxu0 %v647
        %1365 = vmatprep.subr.mxu0 0.0
        %1366 = vmatpush2.xpose.msra.mxu0 %v644
        %1367 = vmatprep.subr.mxu0 0.0
        %1368 = vmatpush2.xpose.msra.mxu0 %v641
        %1369 = vmatprep.subr.mxu0 0.0
        %1370 = vmatpush2.xpose.msra.mxu0 %v638
        %1371 = vmatprep.subr.mxu0 0.0
        %1372 = vmatpush2.xpose.msra.mxu0 %v635
        %1373 = vmatprep.subr.mxu0 0.0
        %1374 = vmatpush2.xpose.msra.mxu0 %v632
        %1375 = vmatprep.subr.mxu0 0.0
        %1376 = vmatpush2.xpose.msra.mxu0 %v629
        %1377 = vmatprep.subr.mxu0 0.0
        %1378 = vmatpush2.xpose.msra.mxu0 %v626
        %1379 = vmatprep.subr.mxu0 0.0
        %1380 = vmatpush2.xpose.msra.mxu0 %v623
        %1381 = vmatprep.mubr.f32.mxu0 0.0
        %1382 = vmatmul.mubr.f32.gmra.mxu0 %v476
        %v1383 = vpop.f32.mrf.mxu0
        %v1384 = vadd.f32 %v472, %v1383
        %v1385 = vpop.f32.mrf.mxu0
        %v1386 = vadd.f32 %v472, %v1385
        %1387 = vdwg.mxu0
        %1388 = vmatprep.subr.mxu0 0.0
        %1389 = vmatpush1.xpose.msra.mxu0 %v716
        %1390 = vmatprep.subr.mxu0 0.0
        %1391 = vmatpush1.xpose.msra.mxu0 %v713
        %1392 = vmatprep.subr.mxu0 0.0
        %1393 = vmatpush1.xpose.msra.mxu0 %v710
        %1394 = vmatprep.subr.mxu0 0.0
        %1395 = vmatpush1.xpose.msra.mxu0 %v707
        %1396 = vmatprep.subr.mxu0 0.0
        %1397 = vmatpush1.xpose.msra.mxu0 %v704
        %1398 = vmatprep.subr.mxu0 0.0
        %1399 = vmatpush1.xpose.msra.mxu0 %v701
        %1400 = vmatprep.subr.mxu0 0.0
        %1401 = vmatpush1.xpose.msra.mxu0 %v698
        %1402 = vmatprep.subr.mxu0 0.0
        %1403 = vmatpush1.xpose.msra.mxu0 %v695
        %1404 = vmatprep.subr.mxu0 0.0
        %1405 = vmatpush1.xpose.msra.mxu0 %v692
        %1406 = vmatprep.subr.mxu0 0.0
        %1407 = vmatpush1.xpose.msra.mxu0 %v689
        %1408 = vmatprep.subr.mxu0 0.0
        %1409 = vmatpush1.xpose.msra.mxu0 %v686
        %1410 = vmatprep.subr.mxu0 0.0
        %1411 = vmatpush1.xpose.msra.mxu0 %v683
        %1412 = vmatprep.subr.mxu0 0.0
        %1413 = vmatpush1.xpose.msra.mxu0 %v680
        %1414 = vmatprep.subr.mxu0 0.0
        %1415 = vmatpush1.xpose.msra.mxu0 %v677
        %1416 = vmatprep.subr.mxu0 0.0
        %1417 = vmatpush1.xpose.msra.mxu0 %v674
        %1418 = vmatprep.subr.mxu0 0.0
        %1419 = vmatpush1.xpose.msra.mxu0 %v671
        %1420 = vmatprep.subr.mxu0 0.0
        %1421 = vmatpush2.xpose.msra.mxu0 %v764
        %1422 = vmatprep.subr.mxu0 0.0
        %1423 = vmatpush2.xpose.msra.mxu0 %v761
        %1424 = vmatprep.subr.mxu0 0.0
        %1425 = vmatpush2.xpose.msra.mxu0 %v758
        %1426 = vmatprep.subr.mxu0 0.0
        %1427 = vmatpush2.xpose.msra.mxu0 %v755
        %1428 = vmatprep.subr.mxu0 0.0
        %1429 = vmatpush2.xpose.msra.mxu0 %v752
        %1430 = vmatprep.subr.mxu0 0.0
        %1431 = vmatpush2.xpose.msra.mxu0 %v749
        %1432 = vmatprep.subr.mxu0 0.0
        %1433 = vmatpush2.xpose.msra.mxu0 %v746
        %1434 = vmatprep.subr.mxu0 0.0
        %1435 = vmatpush2.xpose.msra.mxu0 %v743
        %1436 = vmatprep.subr.mxu0 0.0
        %1437 = vmatpush2.xpose.msra.mxu0 %v740
        %1438 = vmatprep.subr.mxu0 0.0
        %1439 = vmatpush2.xpose.msra.mxu0 %v737
        %1440 = vmatprep.subr.mxu0 0.0
        %1441 = vmatpush2.xpose.msra.mxu0 %v734
        %1442 = vmatprep.subr.mxu0 0.0
        %1443 = vmatpush2.xpose.msra.mxu0 %v731
        %1444 = vmatprep.subr.mxu0 0.0
        %1445 = vmatpush2.xpose.msra.mxu0 %v728
        %1446 = vmatprep.subr.mxu0 0.0
        %1447 = vmatpush2.xpose.msra.mxu0 %v725
        %1448 = vmatprep.subr.mxu0 0.0
        %1449 = vmatpush2.xpose.msra.mxu0 %v722
        %1450 = vmatprep.subr.mxu0 0.0
        %1451 = vmatpush2.xpose.msra.mxu0 %v719
        %1452 = vmatprep.mubr.f32.mxu0 0.0
        %1453 = vmatmul.mubr.f32.gmra.mxu0 %v476
        %v1454 = vpop.f32.mrf.mxu0
        %v1455 = vadd.f32 %v472, %v1454
        %v1456 = vpop.f32.mrf.mxu0
        %v1457 = vadd.f32 %v472, %v1456
        %1458 = vdwg.mxu0
        %1459 = vmatprep.subr.mxu0 0.0
        %1460 = vmatpush1.xpose.msra.mxu0 %v812
        %1461 = vmatprep.subr.mxu0 0.0
        %1462 = vmatpush1.xpose.msra.mxu0 %v809
        %1463 = vmatprep.subr.mxu0 0.0
        %1464 = vmatpush1.xpose.msra.mxu0 %v806
        %1465 = vmatprep.subr.mxu0 0.0
        %1466 = vmatpush1.xpose.msra.mxu0 %v803
        %1467 = vmatprep.subr.mxu0 0.0
        %1468 = vmatpush1.xpose.msra.mxu0 %v800
        %1469 = vmatprep.subr.mxu0 0.0
        %1470 = vmatpush1.xpose.msra.mxu0 %v797
        %1471 = vmatprep.subr.mxu0 0.0
        %1472 = vmatpush1.xpose.msra.mxu0 %v794
        %1473 = vmatprep.subr.mxu0 0.0
        %1474 = vmatpush1.xpose.msra.mxu0 %v791
        %1475 = vmatprep.subr.mxu0 0.0
        %1476 = vmatpush1.xpose.msra.mxu0 %v788
        %1477 = vmatprep.subr.mxu0 0.0
        %1478 = vmatpush1.xpose.msra.mxu0 %v785
        %1479 = vmatprep.subr.mxu0 0.0
        %1480 = vmatpush1.xpose.msra.mxu0 %v782
        %1481 = vmatprep.subr.mxu0 0.0
        %1482 = vmatpush1.xpose.msra.mxu0 %v779
        %1483 = vmatprep.subr.mxu0 0.0
        %1484 = vmatpush1.xpose.msra.mxu0 %v776
        %1485 = vmatprep.subr.mxu0 0.0
        %1486 = vmatpush1.xpose.msra.mxu0 %v773
        %1487 = vmatprep.subr.mxu0 0.0
        %1488 = vmatpush1.xpose.msra.mxu0 %v770
        %1489 = vmatprep.subr.mxu0 0.0
        %1490 = vmatpush1.xpose.msra.mxu0 %v767
        %1491 = vmatprep.subr.mxu0 0.0
        %1492 = vmatpush2.xpose.msra.mxu0 %v860
        %1493 = vmatprep.subr.mxu0 0.0
        %1494 = vmatpush2.xpose.msra.mxu0 %v857
        %1495 = vmatprep.subr.mxu0 0.0
        %1496 = vmatpush2.xpose.msra.mxu0 %v854
        %1497 = vmatprep.subr.mxu0 0.0
        %1498 = vmatpush2.xpose.msra.mxu0 %v851
        %1499 = vmatprep.subr.mxu0 0.0
        %1500 = vmatpush2.xpose.msra.mxu0 %v848
        %1501 = vmatprep.subr.mxu0 0.0
        %1502 = vmatpush2.xpose.msra.mxu0 %v845
        %1503 = vmatprep.subr.mxu0 0.0
        %1504 = vmatpush2.xpose.msra.mxu0 %v842
        %1505 = vmatprep.subr.mxu0 0.0
        %1506 = vmatpush2.xpose.msra.mxu0 %v839
        %1507 = vmatprep.subr.mxu0 0.0
        %1508 = vmatpush2.xpose.msra.mxu0 %v836
        %1509 = vmatprep.subr.mxu0 0.0
        %1510 = vmatpush2.xpose.msra.mxu0 %v833
        %1511 = vmatprep.subr.mxu0 0.0
        %1512 = vmatpush2.xpose.msra.mxu0 %v830
        %1513 = vmatprep.subr.mxu0 0.0
        %1514 = vmatpush2.xpose.msra.mxu0 %v827
        %1515 = vmatprep.subr.mxu0 0.0
        %1516 = vmatpush2.xpose.msra.mxu0 %v824
        %1517 = vmatprep.subr.mxu0 0.0
        %1518 = vmatpush2.xpose.msra.mxu0 %v821
        %1519 = vmatprep.subr.mxu0 0.0
        %1520 = vmatpush2.xpose.msra.mxu0 %v818
        %1521 = vmatprep.subr.mxu0 0.0
        %1522 = vmatpush2.xpose.msra.mxu0 %v815
        %1523 = vmatprep.mubr.f32.mxu0 0.0
        %1524 = vmatmul.mubr.f32.gmra.mxu0 %v476
        %v1525 = vpop.f32.mrf.mxu0
        %v1526 = vadd.f32 %v472, %v1525
        %v1527 = vpop.f32.mrf.mxu0
        %v1528 = vadd.f32 %v472, %v1527
        %1529 = vdwg.mxu0
        %1530 = vmatprep.subr.mxu0 0.0
        %1531 = vmatpush1.xpose.msra.mxu0 %v908
        %1532 = vmatprep.subr.mxu0 0.0
        %1533 = vmatpush1.xpose.msra.mxu0 %v905
        %1534 = vmatprep.subr.mxu0 0.0
        %1535 = vmatpush1.xpose.msra.mxu0 %v902
        %1536 = vmatprep.subr.mxu0 0.0
        %1537 = vmatpush1.xpose.msra.mxu0 %v899
        %1538 = vmatprep.subr.mxu0 0.0
        %1539 = vmatpush1.xpose.msra.mxu0 %v896
        %1540 = vmatprep.subr.mxu0 0.0
        %1541 = vmatpush1.xpose.msra.mxu0 %v893
        %1542 = vmatprep.subr.mxu0 0.0
        %1543 = vmatpush1.xpose.msra.mxu0 %v890
        %1544 = vmatprep.subr.mxu0 0.0
        %1545 = vmatpush1.xpose.msra.mxu0 %v887
        %1546 = vmatprep.subr.mxu0 0.0
        %1547 = vmatpush1.xpose.msra.mxu0 %v884
        %1548 = vmatprep.subr.mxu0 0.0
        %1549 = vmatpush1.xpose.msra.mxu0 %v881
        %1550 = vmatprep.subr.mxu0 0.0
        %1551 = vmatpush1.xpose.msra.mxu0 %v878
        %1552 = vmatprep.subr.mxu0 0.0
        %1553 = vmatpush1.xpose.msra.mxu0 %v875
        %1554 = vmatprep.subr.mxu0 0.0
        %1555 = vmatpush1.xpose.msra.mxu0 %v872
        %1556 = vmatprep.subr.mxu0 0.0
        %1557 = vmatpush1.xpose.msra.mxu0 %v869
        %1558 = vmatprep.subr.mxu0 0.0
        %1559 = vmatpush1.xpose.msra.mxu0 %v866
        %1560 = vmatprep.subr.mxu0 0.0
        %1561 = vmatpush1.xpose.msra.mxu0 %v863
        %1562 = vmatprep.subr.mxu0 0.0
        %1563 = vmatpush2.xpose.msra.mxu0 %v956
        %1564 = vmatprep.subr.mxu0 0.0
        %1565 = vmatpush2.xpose.msra.mxu0 %v953
        %1566 = vmatprep.subr.mxu0 0.0
        %1567 = vmatpush2.xpose.msra.mxu0 %v950
        %1568 = vmatprep.subr.mxu0 0.0
        %1569 = vmatpush2.xpose.msra.mxu0 %v947
        %1570 = vmatprep.subr.mxu0 0.0
        %1571 = vmatpush2.xpose.msra.mxu0 %v944
        %1572 = vmatprep.subr.mxu0 0.0
        %1573 = vmatpush2.xpose.msra.mxu0 %v941
        %1574 = vmatprep.subr.mxu0 0.0
        %1575 = vmatpush2.xpose.msra.mxu0 %v938
        %1576 = vmatprep.subr.mxu0 0.0
        %1577 = vmatpush2.xpose.msra.mxu0 %v935
        %1578 = vmatprep.subr.mxu0 0.0
        %1579 = vmatpush2.xpose.msra.mxu0 %v932
        %1580 = vmatprep.subr.mxu0 0.0
        %1581 = vmatpush2.xpose.msra.mxu0 %v929
        %1582 = vmatprep.subr.mxu0 0.0
        %1583 = vmatpush2.xpose.msra.mxu0 %v926
        %1584 = vmatprep.subr.mxu0 0.0
        %1585 = vmatpush2.xpose.msra.mxu0 %v923
        %1586 = vmatprep.subr.mxu0 0.0
        %1587 = vmatpush2.xpose.msra.mxu0 %v920
        %1588 = vmatprep.subr.mxu0 0.0
        %1589 = vmatpush2.xpose.msra.mxu0 %v917
        %1590 = vmatprep.subr.mxu0 0.0
        %1591 = vmatpush2.xpose.msra.mxu0 %v914
        %1592 = vmatprep.subr.mxu0 0.0
        %1593 = vmatpush2.xpose.msra.mxu0 %v911
        %1594 = vmatprep.mubr.f32.mxu0 0.0
        %1595 = vmatmul.mubr.f32.gmra.mxu0 %v476
        %v1596 = vpop.f32.mrf.mxu0
        %v1597 = vadd.f32 %v472, %v1596
        %v1598 = vpop.f32.mrf.mxu0
        %v1599 = vadd.f32 %v472, %v1598
        %1600 = vdwg.mxu0
        %1601 = vmatprep.subr.mxu0 0.0
        %1602 = vmatpush1.xpose.msra.mxu0 %v1004
        %1603 = vmatprep.subr.mxu0 0.0
        %1604 = vmatpush1.xpose.msra.mxu0 %v1001
        %1605 = vmatprep.subr.mxu0 0.0
        %1606 = vmatpush1.xpose.msra.mxu0 %v998
        %1607 = vmatprep.subr.mxu0 0.0
        %1608 = vmatpush1.xpose.msra.mxu0 %v995
        %1609 = vmatprep.subr.mxu0 0.0
        %1610 = vmatpush1.xpose.msra.mxu0 %v992
        %1611 = vmatprep.subr.mxu0 0.0
        %1612 = vmatpush1.xpose.msra.mxu0 %v989
        %1613 = vmatprep.subr.mxu0 0.0
        %1614 = vmatpush1.xpose.msra.mxu0 %v986
        %1615 = vmatprep.subr.mxu0 0.0
        %1616 = vmatpush1.xpose.msra.mxu0 %v983
        %1617 = vmatprep.subr.mxu0 0.0
        %1618 = vmatpush1.xpose.msra.mxu0 %v980
        %1619 = vmatprep.subr.mxu0 0.0
        %1620 = vmatpush1.xpose.msra.mxu0 %v977
        %1621 = vmatprep.subr.mxu0 0.0
        %1622 = vmatpush1.xpose.msra.mxu0 %v974
        %1623 = vmatprep.subr.mxu0 0.0
        %1624 = vmatpush1.xpose.msra.mxu0 %v971
        %1625 = vmatprep.subr.mxu0 0.0
        %1626 = vmatpush1.xpose.msra.mxu0 %v968
        %1627 = vmatprep.subr.mxu0 0.0
        %1628 = vmatpush1.xpose.msra.mxu0 %v965
        %1629 = vmatprep.subr.mxu0 0.0
        %1630 = vmatpush1.xpose.msra.mxu0 %v962
        %1631 = vmatprep.subr.mxu0 0.0
        %1632 = vmatpush1.xpose.msra.mxu0 %v959
        %1633 = vmatprep.subr.mxu0 0.0
        %1634 = vmatpush2.xpose.msra.mxu0 %v1052
        %1635 = vmatprep.subr.mxu0 0.0
        %1636 = vmatpush2.xpose.msra.mxu0 %v1049
        %1637 = vmatprep.subr.mxu0 0.0
        %1638 = vmatpush2.xpose.msra.mxu0 %v1046
        %1639 = vmatprep.subr.mxu0 0.0
        %1640 = vmatpush2.xpose.msra.mxu0 %v1043
        %1641 = vmatprep.subr.mxu0 0.0
        %1642 = vmatpush2.xpose.msra.mxu0 %v1040
        %1643 = vmatprep.subr.mxu0 0.0
        %1644 = vmatpush2.xpose.msra.mxu0 %v1037
        %1645 = vmatprep.subr.mxu0 0.0
        %1646 = vmatpush2.xpose.msra.mxu0 %v1034
        %1647 = vmatprep.subr.mxu0 0.0
        %1648 = vmatpush2.xpose.msra.mxu0 %v1031
        %1649 = vmatprep.subr.mxu0 0.0
        %1650 = vmatpush2.xpose.msra.mxu0 %v1028
        %1651 = vmatprep.subr.mxu0 0.0
        %1652 = vmatpush2.xpose.msra.mxu0 %v1025
        %1653 = vmatprep.subr.mxu0 0.0
        %1654 = vmatpush2.xpose.msra.mxu0 %v1022
        %1655 = vmatprep.subr.mxu0 0.0
        %1656 = vmatpush2.xpose.msra.mxu0 %v1019
        %1657 = vmatprep.subr.mxu0 0.0
        %1658 = vmatpush2.xpose.msra.mxu0 %v1016
        %1659 = vmatprep.subr.mxu0 0.0
        %1660 = vmatpush2.xpose.msra.mxu0 %v1013
        %1661 = vmatprep.subr.mxu0 0.0
        %1662 = vmatpush2.xpose.msra.mxu0 %v1010
        %1663 = vmatprep.subr.mxu0 0.0
        %1664 = vmatpush2.xpose.msra.mxu0 %v1007
        %1665 = vmatprep.mubr.f32.mxu0 0.0
        %1666 = vmatmul.mubr.f32.gmra.mxu0 %v476
        %v1667 = vpop.f32.mrf.mxu0
        %v1668 = vadd.f32 %v472, %v1667
        %v1669 = vpop.f32.mrf.mxu0
        %v1670 = vadd.f32 %v472, %v1669
        %1671 = vdwg.mxu0
        %1672 = vmatprep.subr.mxu0 0.0
        %1673 = vmatpush1.xpose.msra.mxu0 %v1100
        %1674 = vmatprep.subr.mxu0 0.0
        %1675 = vmatpush1.xpose.msra.mxu0 %v1097
        %1676 = vmatprep.subr.mxu0 0.0
        %1677 = vmatpush1.xpose.msra.mxu0 %v1094
        %1678 = vmatprep.subr.mxu0 0.0
        %1679 = vmatpush1.xpose.msra.mxu0 %v1091
        %1680 = vmatprep.subr.mxu0 0.0
        %1681 = vmatpush1.xpose.msra.mxu0 %v1088
        %1682 = vmatprep.subr.mxu0 0.0
        %1683 = vmatpush1.xpose.msra.mxu0 %v1085
        %1684 = vmatprep.subr.mxu0 0.0
        %1685 = vmatpush1.xpose.msra.mxu0 %v1082
        %1686 = vmatprep.subr.mxu0 0.0
        %1687 = vmatpush1.xpose.msra.mxu0 %v1079
        %1688 = vmatprep.subr.mxu0 0.0
        %1689 = vmatpush1.xpose.msra.mxu0 %v1076
        %1690 = vmatprep.subr.mxu0 0.0
        %1691 = vmatpush1.xpose.msra.mxu0 %v1073
        %1692 = vmatprep.subr.mxu0 0.0
        %1693 = vmatpush1.xpose.msra.mxu0 %v1070
        %1694 = vmatprep.subr.mxu0 0.0
        %1695 = vmatpush1.xpose.msra.mxu0 %v1067
        %1696 = vmatprep.subr.mxu0 0.0
        %1697 = vmatpush1.xpose.msra.mxu0 %v1064
        %1698 = vmatprep.subr.mxu0 0.0
        %1699 = vmatpush1.xpose.msra.mxu0 %v1061
        %1700 = vmatprep.subr.mxu0 0.0
        %1701 = vmatpush1.xpose.msra.mxu0 %v1058
        %1702 = vmatprep.subr.mxu0 0.0
        %1703 = vmatpush1.xpose.msra.mxu0 %v1055
        %1704 = vmatprep.subr.mxu0 0.0
        %1705 = vmatpush2.xpose.msra.mxu0 %v1148
        %1706 = vmatprep.subr.mxu0 0.0
        %1707 = vmatpush2.xpose.msra.mxu0 %v1145
        %1708 = vmatprep.subr.mxu0 0.0
        %1709 = vmatpush2.xpose.msra.mxu0 %v1142
        %1710 = vmatprep.subr.mxu0 0.0
        %1711 = vmatpush2.xpose.msra.mxu0 %v1139
        %1712 = vmatprep.subr.mxu0 0.0
        %1713 = vmatpush2.xpose.msra.mxu0 %v1136
        %1714 = vmatprep.subr.mxu0 0.0
        %1715 = vmatpush2.xpose.msra.mxu0 %v1133
        %1716 = vmatprep.subr.mxu0 0.0
        %1717 = vmatpush2.xpose.msra.mxu0 %v1130
        %1718 = vmatprep.subr.mxu0 0.0
        %1719 = vmatpush2.xpose.msra.mxu0 %v1127
        %1720 = vmatprep.subr.mxu0 0.0
        %1721 = vmatpush2.xpose.msra.mxu0 %v1124
        %1722 = vmatprep.subr.mxu0 0.0
        %1723 = vmatpush2.xpose.msra.mxu0 %v1121
        %1724 = vmatprep.subr.mxu0 0.0
        %1725 = vmatpush2.xpose.msra.mxu0 %v1118
        %1726 = vmatprep.subr.mxu0 0.0
        %1727 = vmatpush2.xpose.msra.mxu0 %v1115
        %1728 = vmatprep.subr.mxu0 0.0
        %1729 = vmatpush2.xpose.msra.mxu0 %v1112
        %1730 = vmatprep.subr.mxu0 0.0
        %1731 = vmatpush2.xpose.msra.mxu0 %v1109
        %1732 = vmatprep.subr.mxu0 0.0
        %1733 = vmatpush2.xpose.msra.mxu0 %v1106
        %1734 = vmatprep.subr.mxu0 0.0
        %1735 = vmatpush2.xpose.msra.mxu0 %v1103
        %1736 = vmatprep.mubr.f32.mxu0 0.0
        %1737 = vmatmul.mubr.f32.gmra.mxu0 %v476
        %v1738 = vpop.f32.mrf.mxu0
        %v1739 = vadd.f32 %v472, %v1738
        %v1740 = vpop.f32.mrf.mxu0
        %v1741 = vadd.f32 %v472, %v1740
        %1742 = vdwg.mxu0
        %1743 = vmatprep.subr.mxu0 0.0
        %1744 = vmatpush1.xpose.msra.mxu0 %v1196
        %1745 = vmatprep.subr.mxu0 0.0
        %1746 = vmatpush1.xpose.msra.mxu0 %v1193
        %1747 = vmatprep.subr.mxu0 0.0
        %1748 = vmatpush1.xpose.msra.mxu0 %v1190
        %1749 = vmatprep.subr.mxu0 0.0
        %1750 = vmatpush1.xpose.msra.mxu0 %v1187
        %1751 = vmatprep.subr.mxu0 0.0
        %1752 = vmatpush1.xpose.msra.mxu0 %v1184
        %1753 = vmatprep.subr.mxu0 0.0
        %1754 = vmatpush1.xpose.msra.mxu0 %v1181
        %1755 = vmatprep.subr.mxu0 0.0
        %1756 = vmatpush1.xpose.msra.mxu0 %v1178
        %1757 = vmatprep.subr.mxu0 0.0
        %1758 = vmatpush1.xpose.msra.mxu0 %v1175
        %1759 = vmatprep.subr.mxu0 0.0
        %1760 = vmatpush1.xpose.msra.mxu0 %v1172
        %1761 = vmatprep.subr.mxu0 0.0
        %1762 = vmatpush1.xpose.msra.mxu0 %v1169
        %1763 = vmatprep.subr.mxu0 0.0
        %1764 = vmatpush1.xpose.msra.mxu0 %v1166
        %1765 = vmatprep.subr.mxu0 0.0
        %1766 = vmatpush1.xpose.msra.mxu0 %v1163
        %1767 = vmatprep.subr.mxu0 0.0
        %1768 = vmatpush1.xpose.msra.mxu0 %v1160
        %1769 = vmatprep.subr.mxu0 0.0
        %1770 = vmatpush1.xpose.msra.mxu0 %v1157
        %1771 = vmatprep.subr.mxu0 0.0
        %1772 = vmatpush1.xpose.msra.mxu0 %v1154
        %1773 = vmatprep.subr.mxu0 0.0
        %1774 = vmatpush1.xpose.msra.mxu0 %v1151
        %1775 = vmatprep.subr.mxu0 0.0
        %1776 = vmatpush2.xpose.msra.mxu0 %v1244
        %1777 = vmatprep.subr.mxu0 0.0
        %1778 = vmatpush2.xpose.msra.mxu0 %v1241
        %1779 = vmatprep.subr.mxu0 0.0
        %1780 = vmatpush2.xpose.msra.mxu0 %v1238
        %1781 = vmatprep.subr.mxu0 0.0
        %1782 = vmatpush2.xpose.msra.mxu0 %v1235
        %1783 = vmatprep.subr.mxu0 0.0
        %1784 = vmatpush2.xpose.msra.mxu0 %v1232
        %1785 = vmatprep.subr.mxu0 0.0
        %1786 = vmatpush2.xpose.msra.mxu0 %v1229
        %1787 = vmatprep.subr.mxu0 0.0
        %1788 = vmatpush2.xpose.msra.mxu0 %v1226
        %1789 = vmatprep.subr.mxu0 0.0
        %1790 = vmatpush2.xpose.msra.mxu0 %v1223
        %1791 = vmatprep.subr.mxu0 0.0
        %1792 = vmatpush2.xpose.msra.mxu0 %v1220
        %1793 = vmatprep.subr.mxu0 0.0
        %1794 = vmatpush2.xpose.msra.mxu0 %v1217
        %1795 = vmatprep.subr.mxu0 0.0
        %1796 = vmatpush2.xpose.msra.mxu0 %v1214
        %1797 = vmatprep.subr.mxu0 0.0
        %1798 = vmatpush2.xpose.msra.mxu0 %v1211
        %1799 = vmatprep.subr.mxu0 0.0
        %1800 = vmatpush2.xpose.msra.mxu0 %v1208
        %1801 = vmatprep.subr.mxu0 0.0
        %1802 = vmatpush2.xpose.msra.mxu0 %v1205
        %1803 = vmatprep.subr.mxu0 0.0
        %1804 = vmatpush2.xpose.msra.mxu0 %v1202
        %1805 = vmatprep.subr.mxu0 0.0
        %1806 = vmatpush2.xpose.msra.mxu0 %v1199
        %1807 = vmatprep.mubr.f32.mxu0 0.0
        %1808 = vmatmul.mubr.f32.gmra.mxu0 %v476
        %v1809 = vpop.f32.mrf.mxu0
        %v1810 = vadd.f32 %v472, %v1809
        %v1811 = vpop.f32.mrf.mxu0
        %v1812 = vadd.f32 %v472, %v1811
        %1813 = vdwg.mxu0
        %v1814 = vxor.u32 %v1313, 2147483648
        %v1815 = vxor.u32 %v1315, 2147483648
        %v1816 = vxor.u32 %v1384, 2147483648
        %v1817 = vxor.u32 %v1386, 2147483648
        %v1818 = vxor.u32 %v1455, 2147483648
        %v1819 = vxor.u32 %v1457, 2147483648
        %v1820 = vxor.u32 %v1526, 2147483648
        %v1821 = vxor.u32 %v1528, 2147483648
        %v1822 = vxor.u32 %v1597, 2147483648
        %v1823 = vxor.u32 %v1599, 2147483648
        %v1824 = vxor.u32 %v1668, 2147483648
        %v1825 = vxor.u32 %v1670, 2147483648
        %v1826 = vxor.u32 %v1739, 2147483648
        %v1827 = vxor.u32 %v1741, 2147483648
        %v1828 = vxor.u32 %v1810, 2147483648
        %v1829 = vxor.u32 %v1812, 2147483648
        %v1830 = vmul.f32 %v1814, 1.442695
        %v1831 = vpow.pop %v1830
        %v1832 = vmul.f32 %v1815, 1.442695
        %v1833 = vpow.pop %v1832
        %v1834 = vmul.f32 %v1816, 1.442695
        %v1835 = vpow.pop %v1834
        %v1836 = vmul.f32 %v1817, 1.442695
        %v1837 = vpow.pop %v1836
        %v1838 = vmul.f32 %v1818, 1.442695
        %v1839 = vpow.pop %v1838
        %v1840 = vmul.f32 %v1819, 1.442695
        %v1841 = vpow.pop %v1840
        %v1842 = vmul.f32 %v1820, 1.442695
        %v1843 = vpow.pop %v1842
        %v1844 = vmul.f32 %v1821, 1.442695
        %v1845 = vpow.pop %v1844
        %v1846 = vmul.f32 %v1822, 1.442695
        %v1847 = vpow.pop %v1846
        %v1848 = vmul.f32 %v1823, 1.442695
        %v1849 = vpow.pop %v1848
        %v1850 = vmul.f32 %v1824, 1.442695
        %v1851 = vpow.pop %v1850
        %v1852 = vmul.f32 %v1825, 1.442695
        %v1853 = vpow.pop %v1852
        %v1854 = vmul.f32 %v1826, 1.442695
        %v1855 = vpow.pop %v1854
        %v1856 = vmul.f32 %v1827, 1.442695
        %v1857 = vpow.pop %v1856
        %v1858 = vmul.f32 %v1828, 1.442695
        %v1859 = vpow.pop %v1858
        %v1860 = vmul.f32 %v1829, 1.442695
        %v1861 = vpow.pop %v1860
        %v1862 = vadd.f32 %v1831, 1.0
        %v1863 = vadd.f32 %v1833, 1.0
        %v1864 = vadd.f32 %v1835, 1.0
        %v1865 = vadd.f32 %v1837, 1.0
        %v1866 = vadd.f32 %v1839, 1.0
        %v1867 = vadd.f32 %v1841, 1.0
        %v1868 = vadd.f32 %v1843, 1.0
        %v1869 = vadd.f32 %v1845, 1.0
        %v1870 = vadd.f32 %v1847, 1.0
        %v1871 = vadd.f32 %v1849, 1.0
        %v1872 = vadd.f32 %v1851, 1.0
        %v1873 = vadd.f32 %v1853, 1.0
        %v1874 = vadd.f32 %v1855, 1.0
        %v1875 = vadd.f32 %v1857, 1.0
        %v1876 = vadd.f32 %v1859, 1.0
        %v1877 = vadd.f32 %v1861, 1.0
        %v1878 = vrcp.pop %v1862
        %v1879 = vmul.f32 1.0, %v1878
        %v1880 = vrcp.pop %v1863
        %v1881 = vmul.f32 1.0, %v1880
        %v1882 = vrcp.pop %v1864
        %v1883 = vmul.f32 1.0, %v1882
        %v1884 = vrcp.pop %v1865
        %v1885 = vmul.f32 1.0, %v1884
        %v1886 = vrcp.pop %v1866
        %v1887 = vmul.f32 1.0, %v1886
        %v1888 = vrcp.pop %v1867
        %v1889 = vmul.f32 1.0, %v1888
        %v1890 = vrcp.pop %v1868
        %v1891 = vmul.f32 1.0, %v1890
        %v1892 = vrcp.pop %v1869
        %v1893 = vmul.f32 1.0, %v1892
        %v1894 = vrcp.pop %v1870
        %v1895 = vmul.f32 1.0, %v1894
        %v1896 = vrcp.pop %v1871
        %v1897 = vmul.f32 1.0, %v1896
        %v1898 = vrcp.pop %v1872
        %v1899 = vmul.f32 1.0, %v1898
        %v1900 = vrcp.pop %v1873
        %v1901 = vmul.f32 1.0, %v1900
        %v1902 = vrcp.pop %v1874
        %v1903 = vmul.f32 1.0, %v1902
        %v1904 = vrcp.pop %v1875
        %v1905 = vmul.f32 1.0, %v1904
        %v1906 = vrcp.pop %v1876
        %v1907 = vmul.f32 1.0, %v1906
        %v1908 = vrcp.pop %v1877
        %v1909 = vmul.f32 1.0, %v1908
        %v1926 = vcombine.low %v1879, %v1881
        %v1927 = vcombine.low %v1883, %v1885
        %v1928 = vcombine.low %v1887, %v1889
        %v1929 = vcombine.low %v1891, %v1893
        %v1931 = vunpack.c.l.s4 1966171168
        %v1932 = vunpack.c.0.s8 %v1931
        %v1933 = vlaneseq
        %v1934 = vshrl.u32 %v1933, 7
        %v1935 = vsub.s32 %v1932, %v1934
        %v1936 = vrot.slane %v1926, %v1935
        %v1938 = vunpack.c.l.s4 1966171168
        %v1939 = vunpack.c.0.s8 %v1938
        %v1940 = vlaneseq
        %v1941 = vshrl.u32 %v1940, 7
        %v1942 = vsub.s32 %v1939, %v1941
        %v1943 = vrot.slane %v1927, %v1942
        %v1945 = vunpack.c.l.s4 1966171168
        %v1946 = vunpack.c.0.s8 %v1945
        %v1947 = vlaneseq
        %v1948 = vshrl.u32 %v1947, 7
        %v1949 = vsub.s32 %v1946, %v1948
        %v1950 = vrot.slane %v1928, %v1949
        %v1952 = vunpack.c.l.s4 1966171168
        %v1953 = vunpack.c.0.s8 %v1952
        %v1954 = vlaneseq
        %v1955 = vshrl.u32 %v1954, 7
        %v1956 = vsub.s32 %v1953, %v1955
        %v1957 = vrot.slane %v1929, %v1956
        %v1958 = vcombine.low %v1936, %v1943
        %v1959 = vcombine.low %v1950, %v1957
        %v1961 = vunpack.c.l.s4 1966171168
        %v1962 = vunpack.c.0.s8 %v1961
        %v1963 = vlaneseq
        %v1964 = vshrl.u32 %v1963, 7
        %v1965 = vsub.s32 %v1962, %v1964
        %v1966 = vrot.slane %v1958, %v1965
        %v1968 = vunpack.c.l.s4 1966171168
        %v1969 = vunpack.c.0.s8 %v1968
        %v1970 = vlaneseq
        %v1971 = vshrl.u32 %v1970, 7
        %v1972 = vsub.s32 %v1969, %v1971
        %v1973 = vrot.slane %v1959, %v1972
        %v1974 = vcombine.low %v1966, %v1973
        %v1975 = vcombine.low %v1895, %v1897
        %v1976 = vcombine.low %v1899, %v1901
        %v1977 = vcombine.low %v1903, %v1905
        %v1978 = vcombine.low %v1907, %v1909
        %v1980 = vunpack.c.l.s4 1966171168
        %v1981 = vunpack.c.0.s8 %v1980
        %v1982 = vlaneseq
        %v1983 = vshrl.u32 %v1982, 7
        %v1984 = vsub.s32 %v1981, %v1983
        %v1985 = vrot.slane %v1975, %v1984
        %v1987 = vunpack.c.l.s4 1966171168
        %v1988 = vunpack.c.0.s8 %v1987
        %v1989 = vlaneseq
        %v1990 = vshrl.u32 %v1989, 7
        %v1991 = vsub.s32 %v1988, %v1990
        %v1992 = vrot.slane %v1976, %v1991
        %v1994 = vunpack.c.l.s4 1966171168
        %v1995 = vunpack.c.0.s8 %v1994
        %v1996 = vlaneseq
        %v1997 = vshrl.u32 %v1996, 7
        %v1998 = vsub.s32 %v1995, %v1997
        %v1999 = vrot.slane %v1977, %v1998
        %v2001 = vunpack.c.l.s4 1966171168
        %v2002 = vunpack.c.0.s8 %v2001
        %v2003 = vlaneseq
        %v2004 = vshrl.u32 %v2003, 7
        %v2005 = vsub.s32 %v2002, %v2004
        %v2006 = vrot.slane %v1978, %v2005
        %v2007 = vcombine.low %v1985, %v1992
        %v2008 = vcombine.low %v1999, %v2006
        %v2010 = vunpack.c.l.s4 1966171168
        %v2011 = vunpack.c.0.s8 %v2010
        %v2012 = vlaneseq
        %v2013 = vshrl.u32 %v2012, 7
        %v2014 = vsub.s32 %v2011, %v2013
        %v2015 = vrot.slane %v2007, %v2014
        %v2017 = vunpack.c.l.s4 1966171168
        %v2018 = vunpack.c.0.s8 %v2017
        %v2019 = vlaneseq
        %v2020 = vshrl.u32 %v2019, 7
        %v2021 = vsub.s32 %v2018, %v2020
        %v2022 = vrot.slane %v2008, %v2021
        %v2023 = vcombine.low %v2015, %v2022
        %2026 = vst [vmem:[%s195] sm:$0xff] %v1974
        %2027 = vst [vmem:[%s195 + $0x8] sm:$0xff] %v2023
        %v2028 = vcombine.high %v1936, %v1943
        %v2029 = vcombine.high %v1950, %v1957
        %v2031 = vunpack.c.l.s4 1966171168
        %v2032 = vunpack.c.0.s8 %v2031
        %v2033 = vlaneseq
        %v2034 = vshrl.u32 %v2033, 7
        %v2035 = vsub.s32 %v2032, %v2034
        %v2036 = vrot.slane %v2028, %v2035
        %v2038 = vunpack.c.l.s4 1966171168
        %v2039 = vunpack.c.0.s8 %v2038
        %v2040 = vlaneseq
        %v2041 = vshrl.u32 %v2040, 7
        %v2042 = vsub.s32 %v2039, %v2041
        %v2043 = vrot.slane %v2029, %v2042
        %v2044 = vcombine.low %v2036, %v2043
        %v2045 = vcombine.high %v1985, %v1992
        %v2046 = vcombine.high %v1999, %v2006
        %v2048 = vunpack.c.l.s4 1966171168
        %v2049 = vunpack.c.0.s8 %v2048
        %v2050 = vlaneseq
        %v2051 = vshrl.u32 %v2050, 7
        %v2052 = vsub.s32 %v2049, %v2051
        %v2053 = vrot.slane %v2045, %v2052
        %v2055 = vunpack.c.l.s4 1966171168
        %v2056 = vunpack.c.0.s8 %v2055
        %v2057 = vlaneseq
        %v2058 = vshrl.u32 %v2057, 7
        %v2059 = vsub.s32 %v2056, %v2058
        %v2060 = vrot.slane %v2046, %v2059
        %v2061 = vcombine.low %v2053, %v2060
        %2064 = vst [vmem:[%s202] sm:$0xff] %v2044
        %2065 = vst [vmem:[%s202 + $0x8] sm:$0xff] %v2061
        %s2066 = sand.u32 %s98, 1
        %s2067 = scalar_lea.sflag [#allocation3], %s2066
        %s2068 = sand.u32 %s98, 1
        %s2069 = smul.addr %s2068, 16
        %s2070 = scalar_lea.vmem [#allocation2], %s2069
        %s2071 = sand.u32 %s124, 1
        %s2072 = scalar_lea.sflag [#allocation5], %s2071
        %s2073 = sand.u32 %s124, 1
        %s2074 = smul.addr %s2073, 16
        %s2075 = scalar_lea.vmem [#allocation4], %s2074
        // Predicated region
        $region33: #{tpu_custom_call.1} parent=31 // pred_check
          %p2076 = pneg %p108
        $region34: #{tpu_custom_call.1} parent=31 // pred_check_branch
          %2078 = sbr.rel (%p2076) target = $region36
        $region35: #{tpu_custom_call.1} parent=31 // pred_region
          %s2079 = smul.u32 16, %s22
          %s2081 = ssub.s32 256, 256
          %2082 = vsyncadd %s2067, %s2081
          %s2083 = smul.addr %s2079, 16
          %s2084 = scalar_lea.hbm %s3, %s2083
          %s2086 = sshll.u32 %s2070, 4
          %s2087 = int_to_ptr.vmem [resolvable:$true] %s2086
          %2089 = dma.vmem_to_hbm [thread:$0]  %s2087, 256, %s2084, %s2067
        $region36: #{tpu_custom_call.1} parent=31 // pred_fallthru
          _
        // Predicated region
        $region37: #{tpu_custom_call.1} parent=31 // pred_check
          %p2090 = pneg %p134
        $region38: #{tpu_custom_call.1} parent=31 // pred_check_branch
          %2092 = sbr.rel (%p2090) target = $region40
        $region39: #{tpu_custom_call.1} parent=31 // pred_region
          %s2093 = smul.u32 16, %s22
          %s2095 = ssub.s32 256, 256
          %2096 = vsyncadd %s2072, %s2095
          %s2097 = smul.addr %s2093, 16
          %s2098 = scalar_lea.hbm %s4, %s2097
          %s2100 = sshll.u32 %s2075, 4
          %s2101 = int_to_ptr.vmem [resolvable:$true] %s2100
          %2103 = dma.vmem_to_hbm [thread:$0]  %s2101, 256, %s2098, %s2072
        $region40: #{tpu_custom_call.1} parent=31 // pred_fallthru
          _
      $region32: #{tpu_custom_call.1} parent=5 // pred_fallthru
        _
      %p2104 = scmp.le.s32.totalorder 2, %s17
      // Predicated region
      $region41: #{tpu_custom_call.1} parent=5 // pred_check
        %p2105 = pneg %p2104
      $region42: #{tpu_custom_call.1} parent=5 // pred_check_branch
        %2107 = sbr.rel (%p2105) target = $region44
      $region43: #{tpu_custom_call.1} parent=5 // pred_region
        %s2108 = ssub.s32 %s17, 2
        // Predicated region
        $region45: #{tpu_custom_call.1} parent=43 // pred_check
          %p2109 = pneg %p114
        $region46: #{tpu_custom_call.1} parent=43 // pred_check_branch
          %2111 = sbr.rel (%p2109) target = $region48
        $region47: #{tpu_custom_call.1} parent=43 // pred_region
          %s2112 = sand.u32 %s99, 1
          %s2113 = scalar_lea.sflag [#allocation3], %s2112
          %s2114 = sand.u32 %s99, 1
          %s2115 = smul.addr %s2114, 16
          %s2116 = scalar_lea.vmem [#allocation2], %s2115
          %2117 = dma.done %s2113, 256
        $region48: #{tpu_custom_call.1} parent=43 // pred_fallthru
          _
        // Predicated region
        $region49: #{tpu_custom_call.1} parent=43 // pred_check
          %p2118 = pneg %p140
        $region50: #{tpu_custom_call.1} parent=43 // pred_check_branch
          %2120 = sbr.rel (%p2118) target = $region52
        $region51: #{tpu_custom_call.1} parent=43 // pred_region
          %s2121 = sand.u32 %s125, 1
          %s2122 = scalar_lea.sflag [#allocation5], %s2121
          %s2123 = sand.u32 %s125, 1
          %s2124 = smul.addr %s2123, 16
          %s2125 = scalar_lea.vmem [#allocation4], %s2124
          %2126 = dma.done %s2122, 256
        $region52: #{tpu_custom_call.1} parent=43 // pred_fallthru
          _
      $region44: #{tpu_custom_call.1} parent=5 // pred_fallthru
        _
    $region6: #{tpu_custom_call.1} parent=1 // loop_footer
      %s21 = sadd.s32 1, %s17
    $region7: #{tpu_custom_call.1} parent=1 // loop_footer_branch
      %16 = sbr.rel target = $region3
    $region8: #{tpu_custom_call.1} parent=1 // loop_exit
      _
    %2127 = vsyncpa [#allocation3], 1
    %s2128 = scalar_lea.sflag [#allocation3], 1
    %2129 = vsyncpa %s2128, 1
    %2130 = vsyncpa [#allocation5], 1
    %s2131 = scalar_lea.sflag [#allocation5], 1
    %2132 = vsyncpa %s2131, 1

</llo_original>
